<compile_context>
chip_gen: v7x
topology: tpu7x:2x2x1
jax: 0.10.0
libtpu: 0.0.40
codegen_flags: <defaults>
</compile_context>

<pallas_src>
import functools

import jax
import jax.numpy as jnp
from jax.experimental import pallas as pl
from jax.experimental.pallas import tpu as pltpu


def _round_up(n, m):
    return ((n + m - 1) // m) * m


def dwsep_kernel(*refs, k, th, halo, ow, mxu_dtype):
    """Fused depthwise (kxk, groups=Cin) + pointwise (1x1) conv on one strip.

    refs (halo > 0):  x_body, x_halo, wdw, wpw, out, strip_scratch
    refs (halo == 0): x_body, wdw, wpw, out
    """
    if halo > 0:
        xb_ref, xh_ref, wdw_ref, wpw_ref, o_ref, xs_ref = refs
        # Assemble the halo'd input strip (th + halo rows) in VMEM, keeping the
        # input dtype (no full-tile f32 upcast).  Both writes are along the
        # major H axis, i.e. whole (W, C) sub-tiles -> no relayout.
        xs_ref[:, :th] = xb_ref[...]
        xs_ref[:, th:] = xh_ref[...]
        x_ref = xs_ref
    else:
        xb_ref, wdw_ref, wpw_ref, o_ref = refs
        x_ref = xb_ref

    wdw = wdw_ref[...]                        # (k*k, Cin_p) f32 taps
    bt = x_ref.shape[0]
    cin = x_ref.shape[-1]
    cout = o_ref.shape[-1]

    # ---- depthwise conv: one W-shift per dx (sublane axis), reused for all dy
    acc = jnp.zeros((bt, th, ow, cin), jnp.float32)
    for dx in range(k):
        x_dx = x_ref[:, :, dx:dx + ow, :]     # (bt, th+halo, ow, Cin_p)
        for dy in range(k):
            tap = wdw[dy * k + dx]            # (Cin_p,) per-channel tap
            # dy slice is along the major H axis (cheap); promotion to f32
            # happens inside the tap multiply.
            acc = acc + x_dx[:, dy:dy + th] * tap

    # ---- pointwise 1x1 conv: single MXU matmul over channels ----------------
    lhs = acc if mxu_dtype is None else acc.astype(mxu_dtype)
    y = jnp.dot(lhs.reshape(bt * th * ow, cin), wpw_ref[...],
                preferred_element_type=jnp.float32)
    o_ref[...] = y.reshape(bt, th, ow, cout).astype(o_ref.dtype)


def _choose_tiling(B, out_h, halo, *, fits, io_bytes, io_target,
                   max_strip_rows=None):
    """Pick (batch-per-step, rows-per-strip, n_strips, padded out_h)."""
    unit = max(halo, 1)                        # strip rows must be % halo == 0
    th_max = _round_up(max(out_h, 1), unit)
    if max_strip_rows is not None:
        th_max = min(th_max, _round_up(max(max_strip_rows, 1), unit))

    if fits(1, th_max):
        th = th_max
    else:
        th = unit
        while th * 2 <= th_max and fits(1, th * 2):
            th *= 2                            # doubling keeps th % unit == 0

    bt = 1
    if th == th_max:                           # only batch whole-height strips
        for cand in range(2, B + 1):
            if B % cand == 0 and fits(cand, th) and io_bytes(cand, th) <= io_target:
                bt = cand

    out_h_pad = _round_up(max(out_h, 1), th)
    n_strips = out_h_pad // th

    # Keep >= 2 grid steps when possible (v7x has 2 TensorCores and the
    # pipeline needs >= 2 steps to overlap DMA with compute).
    if n_strips * (B // bt) < 2 and bt > 1:
        for cand in range(bt - 1, 0, -1):
            if B % cand == 0 and (B // cand) * n_strips >= 2:
                bt = cand
                break
    return bt, th, n_strips, out_h_pad


def depthwise_separable_conv(x, w_dw, w_pw, *, stride=1, use_bf16_mxu=True,
                             max_strip_rows=None):
    """x: (B, Cin, H, W); w_dw: (Cin, 1, k, k); w_pw: (Cout, Cin, 1, 1).

    Matches nn.Conv2d(Cin, Cin, k, stride, groups=Cin, padding=k//2, bias=False)
    followed by nn.Conv2d(Cin, Cout, 1, bias=False).
    `max_strip_rows` is an override to force H-strip tiling (testing/tuning).
    """
    B, Cin, H, W = x.shape
    k = w_dw.shape[-1]
    Cout = w_pw.shape[0]
    p = k // 2
    halo = k - 1
    out_h = H + 2 * p - k + 1                  # stride-1 output extent
    out_w = W + 2 * p - k + 1

    cin_p = _round_up(Cin, 128)                # lane axis -> multiple of 128
    cout_p = _round_up(Cout, 128)
    out_w_p = _round_up(out_w, 8)              # sublane axis -> multiple of 8
    wp_p = out_w_p + k - 1                     # padded input width

    in_esize = x.dtype.itemsize
    out_esize = in_esize
    mxu_dtype = jnp.bfloat16 if use_bf16_mxu else None
    mxu_esize = 2 if use_bf16_mxu else 4

    # ---- VMEM budget (generation-aware) --------------------------------------
    try:
        cap = int(getattr(pltpu.get_tpu_info(), "vmem_capacity_bytes",
                          64 * 1024 * 1024))
    except Exception:
        cap = 64 * 1024 * 1024                 # conservative: v7x-class VMEM
    vmem_limit = min(int(cap * 0.75), 96 * 1024 * 1024)   # ~48 MiB v7x, 96 MiB v5e/v6e
    tile_budget = int(vmem_limit * 0.6)        # headroom for compiler temps
    io_target = 16 * 1024 * 1024               # well past the HBM-roofline knee

    def step_bytes(bt, th):
        # double-buffered in/out blocks + in-kernel intermediates
        body = bt * th * wp_p * cin_p * in_esize
        halo_b = bt * halo * wp_p * cin_p * in_esize
        out_b = bt * th * out_w_p * cout_p * out_esize
        strip = bt * (th + halo) * wp_p * cin_p * in_esize        # scratch
        acc = bt * th * out_w_p * cin_p * 4                       # f32 accumulator
        x_dx = bt * (th + halo) * out_w_p * cin_p * in_esize      # hoisted shift
        lhs = bt * th * out_w_p * cin_p * mxu_esize               # matmul lhs
        y = bt * th * out_w_p * cout_p * 4                        # matmul result
        wts = 2 * (k * k * cin_p * 4 + cin_p * cout_p * mxu_esize)
        return 2 * (body + halo_b + out_b) + strip + acc + x_dx + lhs + y + wts

    def io_bytes(bt, th):
        return bt * ((th + halo) * wp_p * cin_p * in_esize
                     + th * out_w_p * cout_p * out_esize)

    bt, th, n_strips, out_h_pad = _choose_tiling(
        B, out_h, halo,
        fits=lambda bt_, th_: step_bytes(bt_, th_) <= tile_budget,
        io_bytes=io_bytes, io_target=io_target, max_strip_rows=max_strip_rows)

    hp_p = out_h_pad + k - 1                   # == n_strips*th + halo

    # ---- layout & padding (NHWC, channels on lanes) ---------------------------
    x_nhwc = jnp.transpose(x, (0, 2, 3, 1))
    x_pad = jnp.pad(x_nhwc, ((0, 0),
                             (p, hp_p - H - p),
                             (p, wp_p - W - p),
                             (0, cin_p - Cin)))

    # depthwise taps: (Cin,1,k,k) -> (k*k, Cin_p)  (tap-major, channels on lanes)
    wdw = jnp.transpose(w_dw.reshape(Cin, k * k), (1, 0)).astype(jnp.float32)
    wdw = jnp.pad(wdw, ((0, 0), (0, cin_p - Cin)))
    # pointwise: (Cout,Cin,1,1) -> (Cin_p, Cout_p), pre-transposed for the MXU
    wpw = jnp.transpose(w_pw.reshape(Cout, Cin), (1, 0))
    wpw = jnp.pad(wpw, ((0, cin_p - Cin), (0, cout_p - Cout)))
    wpw = wpw.astype(jnp.bfloat16 if use_bf16_mxu else jnp.float32)

    kern = functools.partial(dwsep_kernel, k=k, th=th, halo=halo, ow=out_w_p,
                             mxu_dtype=mxu_dtype)

    in_specs = [pl.BlockSpec((bt, th, wp_p, cin_p), lambda b, i: (b, i, 0, 0))]
    operands = [x_pad]
    scratch = []
    if halo > 0:
        hb = th // halo                         # th % halo == 0 by construction
        in_specs.append(pl.BlockSpec((bt, halo, wp_p, cin_p),
                                     lambda b, i, hb=hb: (b, (i + 1) * hb, 0, 0)))
        operands.append(x_pad)                  # same array, halo window
        scratch.append(pltpu.VMEM((bt, th + halo, wp_p, cin_p), x_pad.dtype))
    in_specs += [pl.BlockSpec((k * k, cin_p), lambda b, i: (0, 0)),
                 pl.BlockSpec((cin_p, cout_p), lambda b, i: (0, 0))]
    operands += [wdw, wpw]

    out = pl.pallas_call(
        kern,
        out_shape=jax.ShapeDtypeStruct((B, out_h_pad, out_w_p, cout_p), x.dtype),
        grid_spec=pltpu.PrefetchScalarGridSpec(
            num_scalar_prefetch=0,
            grid=(B // bt, n_strips),
            in_specs=in_specs,
            out_specs=pl.BlockSpec((bt, th, out_w_p, cout_p),
                                   lambda b, i: (b, i, 0, 0)),
            scratch_shapes=scratch),
        compiler_params=pltpu.CompilerParams(
            dimension_semantics=("parallel", "parallel"),
            vmem_limit_bytes=vmem_limit),
    )(*operands)

    out = out[:, :out_h, :out_w, :Cout]         # drop alignment padding
    out = jnp.transpose(out, (0, 3, 1, 2))      # back to NCHW
    if stride > 1:
        # TODO(synk): apply the stride inside the kernel (strided taps + strided
        # output tiles) to avoid ~stride^2 wasted VALU/MXU/HBM work; subsampling
        # the stride-1 result after the 1x1 conv is mathematically exact.
        out = out[:, :, ::stride, ::stride]
    return out


def dwsep_reference(x, w_dw, w_pw, *, stride=1):
    """Pure-JAX reference matching the PyTorch forward."""
    k = w_dw.shape[-1]
    p = k // 2
    y = jax.lax.conv_general_dilated(
        x, w_dw, window_strides=(stride, stride), padding=((p, p), (p, p)),
        dimension_numbers=("NCHW", "OIHW", "NCHW"),
        feature_group_count=x.shape[1])
    y = jax.lax.conv_general_dilated(
        y, w_pw, window_strides=(1, 1), padding="VALID",
        dimension_numbers=("NCHW", "OIHW", "NCHW"))
    return y


if __name__ == "__main__":
    B, Cin, Cout, H, W, K = 2, 4, 8, 16, 16, 3

    key = jax.random.PRNGKey(0)
    kx, kd, kp = jax.random.split(key, 3)
    x = jax.random.normal(kx, (B, Cin, H, W), dtype=jnp.float32)
    w_dw = jax.random.normal(kd, (Cin, 1, K, K), dtype=jnp.float32) * 0.3
    w_pw = jax.random.normal(kp, (Cout, Cin, 1, 1), dtype=jnp.float32) * 0.3

    ref1 = dwsep_reference(x, w_dw, w_pw, stride=1)

    # 1) f32 MXU path: exact structural check (tight tolerance).
    out = jax.block_until_ready(
        depthwise_separable_conv(x, w_dw, w_pw, stride=1, use_bf16_mxu=False))
    assert out.shape == ref1.shape, (out.shape, ref1.shape)
    assert jnp.allclose(out, ref1, atol=1e-4, rtol=1e-4), (
        f"f32 path mismatch: max abs err {jnp.max(jnp.abs(out - ref1))}")

    # 2) default bf16-MXU path (loosened tolerance for bf16 matmul operands).
    out = jax.block_until_ready(depthwise_separable_conv(x, w_dw, w_pw, stride=1))
    assert jnp.allclose(out, ref1, atol=2e-2, rtol=2e-2), (
        f"bf16 path mismatch: max abs err {jnp.max(jnp.abs(out - ref1))}")

    # 3) force H-strip tiling (exercises the halo assembly + batched strips).
    out = jax.block_until_ready(
        depthwise_separable_conv(x, w_dw, w_pw, stride=1, max_strip_rows=8))
    assert jnp.allclose(out, ref1, atol=2e-2, rtol=2e-2), (
        f"strip path mismatch: max abs err {jnp.max(jnp.abs(out - ref1))}")

    # 4) stride=2 path.
    ref2 = dwsep_reference(x, w_dw, w_pw, stride=2)
    out = jax.block_until_ready(depthwise_separable_conv(x, w_dw, w_pw, stride=2))
    assert out.shape == ref2.shape, (out.shape, ref2.shape)
    assert jnp.allclose(out, ref2, atol=2e-2, rtol=2e-2), (
        f"stride path mismatch: max abs err {jnp.max(jnp.abs(out - ref2))}")

    print("KERNEL_OK")
</pallas_src>

<mosaic_0001>
module attributes {stable_mosaic.version = 11 : i64} {
  func.func @dwsep_kernel(%arg0: i32, %arg1: i32, %arg2: memref<1x16x18x128xf32, #tpu.memory_space<vmem>>, %arg3: memref<1x2x18x128xf32, #tpu.memory_space<vmem>>, %arg4: memref<9x128xf32, #tpu.memory_space<vmem>>, %arg5: memref<128x128xf32, #tpu.memory_space<vmem>>, %arg6: memref<1x16x16x128xf32, #tpu.memory_space<vmem>>, %arg7: memref<1x18x18x128xf32, #tpu.memory_space<vmem>>) attributes {dimension_semantics = [#tpu.dimension_semantics<parallel>, #tpu.dimension_semantics<parallel>], iteration_bounds = array<i64: 2, 1>, scalar_prefetch = 0 : i64, scratch_operands = 1 : i64, tpu.core_type = #tpu.core_type<tc>, window_params = [{transform_indices = @transform_0, window_bounds = array<i64: 1, 16, 18, 128>}, {transform_indices = @transform_1, window_bounds = array<i64: 1, 2, 18, 128>}, {pipeline_mode = #tpu.pipeline_mode<synchronous>, transform_indices = @transform_2, window_bounds = array<i64: 9, 128>}, {pipeline_mode = #tpu.pipeline_mode<synchronous>, transform_indices = @transform_3, window_bounds = array<i64: 128, 128>}, {transform_indices = @transform_4, window_bounds = array<i64: 1, 16, 16, 128>}]} {
    %c0 = arith.constant 0 : index
    %c0_0 = arith.constant 0 : index
    %c0_1 = arith.constant 0 : index
    %c0_2 = arith.constant 0 : index
    %0 = vector.load %arg2[%c0, %c0_0, %c0_1, %c0_2] : memref<1x16x18x128xf32, #tpu.memory_space<vmem>>, vector<1x16x18x128xf32>
    %c0_3 = arith.constant 0 : index
    %c0_4 = arith.constant 0 : index
    %c0_5 = arith.constant 0 : index
    %c0_6 = arith.constant 0 : index
    %1 = vector.load %arg7[%c0_3, %c0_4, %c0_5, %c0_6] : memref<1x18x18x128xf32, #tpu.memory_space<vmem>>, vector<1x16x18x128xf32>
    tpu.vector_store %arg7[%c0_3, %c0_4, %c0_5, %c0_6], %0 {strides = array<i32>} : memref<1x18x18x128xf32, #tpu.memory_space<vmem>>, vector<1x16x18x128xf32>,
    %c0_7 = arith.constant 0 : index
    %c0_8 = arith.constant 0 : index
    %c0_9 = arith.constant 0 : index
    %c0_10 = arith.constant 0 : index
    %2 = vector.load %arg3[%c0_7, %c0_8, %c0_9, %c0_10] : memref<1x2x18x128xf32, #tpu.memory_space<vmem>>, vector<1x2x18x128xf32>
    %c0_11 = arith.constant 0 : index
    %c16 = arith.constant 16 : index
    %c0_12 = arith.constant 0 : index
    %c0_13 = arith.constant 0 : index
    %3 = vector.load %arg7[%c0_11, %c16, %c0_12, %c0_13] : memref<1x18x18x128xf32, #tpu.memory_space<vmem>>, vector<1x2x18x128xf32>
    tpu.vector_store %arg7[%c0_11, %c16, %c0_12, %c0_13], %2 {strides = array<i32>} : memref<1x18x18x128xf32, #tpu.memory_space<vmem>>, vector<1x2x18x128xf32>,
    %c0_14 = arith.constant 0 : index
    %c0_15 = arith.constant 0 : index
    %4 = vector.load %arg4[%c0_14, %c0_15] : memref<9x128xf32, #tpu.memory_space<vmem>>, vector<9x128xf32>
    %cst = arith.constant 0.000000e+00 : f32
    %5 = vector.broadcast %cst : f32 to vector<1x16x16x128xf32>
    %c0_16 = arith.constant 0 : index
    %c0_17 = arith.constant 0 : index
    %c0_18 = arith.constant 0 : index
    %c0_19 = arith.constant 0 : index
    %6 = vector.load %arg7[%c0_16, %c0_17, %c0_18, %c0_19] : memref<1x18x18x128xf32, #tpu.memory_space<vmem>>, vector<1x18x16x128xf32>
    %7 = vector.extract_strided_slice %4 {offsets = [0, 0], sizes = [1, 128], strides = [1, 1]} : vector<9x128xf32> to vector<1x128xf32>
    %8 = vector.shape_cast %7 : vector<1x128xf32> to vector<128xf32>
    %9 = vector.extract_strided_slice %6 {offsets = [0, 0, 0, 0], sizes = [1, 16, 16, 128], strides = [1, 1, 1, 1]} : vector<1x18x16x128xf32> to vector<1x16x16x128xf32>
    %10 = vector.shape_cast %8 : vector<128xf32> to vector<1x1x1x128xf32>
    %11 = vector.broadcast %10 : vector<1x1x1x128xf32> to vector<1x16x16x128xf32>
    %12 = arith.mulf %9, %11 : vector<1x16x16x128xf32>
    %13 = arith.addf %5, %12 : vector<1x16x16x128xf32>
    %14 = vector.extract_strided_slice %4 {offsets = [3, 0], sizes = [1, 128], strides = [1, 1]} : vector<9x128xf32> to vector<1x128xf32>
    %15 = vector.shape_cast %14 : vector<1x128xf32> to vector<128xf32>
    %16 = vector.extract_strided_slice %6 {offsets = [0, 1, 0, 0], sizes = [1, 16, 16, 128], strides = [1, 1, 1, 1]} : vector<1x18x16x128xf32> to vector<1x16x16x128xf32>
    %17 = vector.shape_cast %15 : vector<128xf32> to vector<1x1x1x128xf32>
    %18 = vector.broadcast %17 : vector<1x1x1x128xf32> to vector<1x16x16x128xf32>
    %19 = arith.mulf %16, %18 : vector<1x16x16x128xf32>
    %20 = arith.addf %13, %19 : vector<1x16x16x128xf32>
    %21 = vector.extract_strided_slice %4 {offsets = [6, 0], sizes = [1, 128], strides = [1, 1]} : vector<9x128xf32> to vector<1x128xf32>
    %22 = vector.shape_cast %21 : vector<1x128xf32> to vector<128xf32>
    %23 = vector.extract_strided_slice %6 {offsets = [0, 2, 0, 0], sizes = [1, 16, 16, 128], strides = [1, 1, 1, 1]} : vector<1x18x16x128xf32> to vector<1x16x16x128xf32>
    %24 = vector.shape_cast %22 : vector<128xf32> to vector<1x1x1x128xf32>
    %25 = vector.broadcast %24 : vector<1x1x1x128xf32> to vector<1x16x16x128xf32>
    %26 = arith.mulf %23, %25 : vector<1x16x16x128xf32>
    %27 = arith.addf %20, %26 : vector<1x16x16x128xf32>
    %c0_20 = arith.constant 0 : index
    %c0_21 = arith.constant 0 : index
    %c1 = arith.constant 1 : index
    %c0_22 = arith.constant 0 : index
    %28 = vector.load %arg7[%c0_20, %c0_21, %c1, %c0_22] : memref<1x18x18x128xf32, #tpu.memory_space<vmem>>, vector<1x18x16x128xf32>
    %29 = vector.extract_strided_slice %4 {offsets = [1, 0], sizes = [1, 128], strides = [1, 1]} : vector<9x128xf32> to vector<1x128xf32>
    %30 = vector.shape_cast %29 : vector<1x128xf32> to vector<128xf32>
    %31 = vector.extract_strided_slice %28 {offsets = [0, 0, 0, 0], sizes = [1, 16, 16, 128], strides = [1, 1, 1, 1]} : vector<1x18x16x128xf32> to vector<1x16x16x128xf32>
    %32 = vector.shape_cast %30 : vector<128xf32> to vector<1x1x1x128xf32>
    %33 = vector.broadcast %32 : vector<1x1x1x128xf32> to vector<1x16x16x128xf32>
    %34 = arith.mulf %31, %33 : vector<1x16x16x128xf32>
    %35 = arith.addf %27, %34 : vector<1x16x16x128xf32>
    %36 = vector.extract_strided_slice %4 {offsets = [4, 0], sizes = [1, 128], strides = [1, 1]} : vector<9x128xf32> to vector<1x128xf32>
    %37 = vector.shape_cast %36 : vector<1x128xf32> to vector<128xf32>
    %38 = vector.extract_strided_slice %28 {offsets = [0, 1, 0, 0], sizes = [1, 16, 16, 128], strides = [1, 1, 1, 1]} : vector<1x18x16x128xf32> to vector<1x16x16x128xf32>
    %39 = vector.shape_cast %37 : vector<128xf32> to vector<1x1x1x128xf32>
    %40 = vector.broadcast %39 : vector<1x1x1x128xf32> to vector<1x16x16x128xf32>
    %41 = arith.mulf %38, %40 : vector<1x16x16x128xf32>
    %42 = arith.addf %35, %41 : vector<1x16x16x128xf32>
    %43 = vector.extract_strided_slice %4 {offsets = [7, 0], sizes = [1, 128], strides = [1, 1]} : vector<9x128xf32> to vector<1x128xf32>
    %44 = vector.shape_cast %43 : vector<1x128xf32> to vector<128xf32>
    %45 = vector.extract_strided_slice %28 {offsets = [0, 2, 0, 0], sizes = [1, 16, 16, 128], strides = [1, 1, 1, 1]} : vector<1x18x16x128xf32> to vector<1x16x16x128xf32>
    %46 = vector.shape_cast %44 : vector<128xf32> to vector<1x1x1x128xf32>
    %47 = vector.broadcast %46 : vector<1x1x1x128xf32> to vector<1x16x16x128xf32>
    %48 = arith.mulf %45, %47 : vector<1x16x16x128xf32>
    %49 = arith.addf %42, %48 : vector<1x16x16x128xf32>
    %c0_23 = arith.constant 0 : index
    %c0_24 = arith.constant 0 : index
    %c2 = arith.constant 2 : index
    %c0_25 = arith.constant 0 : index
    %50 = vector.load %arg7[%c0_23, %c0_24, %c2, %c0_25] : memref<1x18x18x128xf32, #tpu.memory_space<vmem>>, vector<1x18x16x128xf32>
    %51 = vector.extract_strided_slice %4 {offsets = [2, 0], sizes = [1, 128], strides = [1, 1]} : vector<9x128xf32> to vector<1x128xf32>
    %52 = vector.shape_cast %51 : vector<1x128xf32> to vector<128xf32>
    %53 = vector.extract_strided_slice %50 {offsets = [0, 0, 0, 0], sizes = [1, 16, 16, 128], strides = [1, 1, 1, 1]} : vector<1x18x16x128xf32> to vector<1x16x16x128xf32>
    %54 = vector.shape_cast %52 : vector<128xf32> to vector<1x1x1x128xf32>
    %55 = vector.broadcast %54 : vector<1x1x1x128xf32> to vector<1x16x16x128xf32>
    %56 = arith.mulf %53, %55 : vector<1x16x16x128xf32>
    %57 = arith.addf %49, %56 : vector<1x16x16x128xf32>
    %58 = vector.extract_strided_slice %4 {offsets = [5, 0], sizes = [1, 128], strides = [1, 1]} : vector<9x128xf32> to vector<1x128xf32>
    %59 = vector.shape_cast %58 : vector<1x128xf32> to vector<128xf32>
    %60 = vector.extract_strided_slice %50 {offsets = [0, 1, 0, 0], sizes = [1, 16, 16, 128], strides = [1, 1, 1, 1]} : vector<1x18x16x128xf32> to vector<1x16x16x128xf32>
    %61 = vector.shape_cast %59 : vector<128xf32> to vector<1x1x1x128xf32>
    %62 = vector.broadcast %61 : vector<1x1x1x128xf32> to vector<1x16x16x128xf32>
    %63 = arith.mulf %60, %62 : vector<1x16x16x128xf32>
    %64 = arith.addf %57, %63 : vector<1x16x16x128xf32>
    %65 = vector.extract_strided_slice %4 {offsets = [8, 0], sizes = [1, 128], strides = [1, 1]} : vector<9x128xf32> to vector<1x128xf32>
    %66 = vector.shape_cast %65 : vector<1x128xf32> to vector<128xf32>
    %67 = vector.extract_strided_slice %50 {offsets = [0, 2, 0, 0], sizes = [1, 16, 16, 128], strides = [1, 1, 1, 1]} : vector<1x18x16x128xf32> to vector<1x16x16x128xf32>
    %68 = vector.shape_cast %66 : vector<128xf32> to vector<1x1x1x128xf32>
    %69 = vector.broadcast %68 : vector<1x1x1x128xf32> to vector<1x16x16x128xf32>
    %70 = arith.mulf %67, %69 : vector<1x16x16x128xf32>
    %71 = arith.addf %64, %70 : vector<1x16x16x128xf32>
    %72 = vector.shape_cast %71 : vector<1x16x16x128xf32> to vector<256x128xf32>
    %c0_26 = arith.constant 0 : index
    %c0_27 = arith.constant 0 : index
    %73 = vector.load %arg5[%c0_26, %c0_27] : memref<128x128xf32, #tpu.memory_space<vmem>>, vector<128x128xf32>
    %cst_28 = arith.constant dense<0.000000e+00> : vector<256x128xf32>
    %74 = tpu.matmul %72, %73, %cst_28 {dimension_numbers = #tpu.dot_dimension_numbers<[1], [0], [0], [1], [0, 0, 1, 1], [], []>} : vector<256x128xf32>, vector<128x128xf32>, vector<256x128xf32> -> vector<256x128xf32>
    %75 = vector.shape_cast %74 : vector<256x128xf32> to vector<1x16x16x128xf32>
    %c0_29 = arith.constant 0 : index
    %c0_30 = arith.constant 0 : index
    %c0_31 = arith.constant 0 : index
    %c0_32 = arith.constant 0 : index
    %76 = vector.load %arg6[%c0_29, %c0_30, %c0_31, %c0_32] : memref<1x16x16x128xf32, #tpu.memory_space<vmem>>, vector<1x16x16x128xf32>
    tpu.vector_store %arg6[%c0_29, %c0_30, %c0_31, %c0_32], %75 {strides = array<i32>} : memref<1x16x16x128xf32, #tpu.memory_space<vmem>>, vector<1x16x16x128xf32>,
    return
  }
  func.func @transform_0(%arg0: i32, %arg1: i32) -> (i32, i32, i32, i32) {
    %c0_i32 = arith.constant 0 : i32
    %c0_i32_0 = arith.constant 0 : i32
    %c0_i32_1 = arith.constant 0 : i32
    return %arg0, %arg1, %c0_i32, %c0_i32_0 : i32, i32, i32, i32
  }
  func.func @transform_1(%arg0: i32, %arg1: i32) -> (i32, i32, i32, i32) {
    %c1_i32 = arith.constant 1 : i32
    %0 = arith.addi %arg1, %c1_i32 : i32
    %c8_i32 = arith.constant 8 : i32
    %1 = arith.muli %0, %c8_i32 : i32
    %c0_i32 = arith.constant 0 : i32
    %c0_i32_0 = arith.constant 0 : i32
    %c0_i32_1 = arith.constant 0 : i32
    return %arg0, %1, %c0_i32, %c0_i32_0 : i32, i32, i32, i32
  }
  func.func @transform_2(%arg0: i32, %arg1: i32) -> (i32, i32) {
    %c0_i32 = arith.constant 0 : i32
    %c0_i32_0 = arith.constant 0 : i32
    %c0_i32_1 = arith.constant 0 : i32
    return %c0_i32, %c0_i32_0 : i32, i32
  }
  func.func @transform_3(%arg0: i32, %arg1: i32) -> (i32, i32) {
    %c0_i32 = arith.constant 0 : i32
    %c0_i32_0 = arith.constant 0 : i32
    %c0_i32_1 = arith.constant 0 : i32
    return %c0_i32, %c0_i32_0 : i32, i32
  }
  func.func @transform_4(%arg0: i32, %arg1: i32) -> (i32, i32, i32, i32) {
    %c0_i32 = arith.constant 0 : i32
    %c0_i32_0 = arith.constant 0 : i32
    %c0_i32_1 = arith.constant 0 : i32
    return %arg0, %arg1, %c0_i32, %c0_i32_0 : i32, i32, i32, i32
  }
}

</mosaic_0001>

<llo_original>
// kernel: tpu_custom_call.1
$region0: #{tpu_custom_call.1}
  #allocation0 [shape = 'u32[]', space=smem, size = 0x4, offset = 0x4, fixed_abs, tag = 'smem constant byte address 0x4 - core index']
  #allocation1 [shape = 'u32[144,128]{1,0:T(1,128)}', space=vmem, size = 0x12000, scoped, tag = 'internal scratch']
  #allocation2 [shape = 'f32[1,18,18,128]{3,2,1,0:T(8,128)}', space=vmem, size = 0x36000, scoped, tag = 'scratch operand']
  %s0 = inlined_call_operand.vmem [shape: f32[2,18,18,128], index: 0, kind: input, shape index: {}]
  %s1 = inlined_call_operand.vmem [shape: f32[2,18,18,128], index: 1, kind: input, shape index: {}]
  %s2 = inlined_call_operand.vmem [shape: f32[9,128], index: 2, kind: input, shape index: {}]
  %s3 = inlined_call_operand.vmem [shape: f32[128,128], index: 3, kind: input, shape index: {}]
  %s4 = inlined_call_operand.hbm [shape: f32[2,16,16,128], index: 4, kind: output, shape index: {}]
  %s5 = sld [smem:[#allocation0]]
  $region49: #{tpu_custom_call.1} parent=0
    _
  %s7 = ssub.s32 1, %s5
  %s8 = scalar_select 0, %s7, %s5
  $region1: #{tpu_custom_call.1} parent=0
    #allocation3 [shape = 'u8[262144]{0}', space=vmem, size = 0x40000, scoped, tag = 'output window, operand 0']
    #allocation4 [shape = 's32[2]{0}', space=sflag, size = 0x8, scoped, tag = 'scoped memory for tpu_custom_call.1']
    %9 = vsyncpa [#allocation4], 0
    %s10 = scalar_lea.sflag [#allocation4], 1
    %11 = vsyncpa %s10, 0
    loop: start=0, step=1, limit=4
    $region2: #{tpu_custom_call.1} parent=1 // loop_pre_header
      _
    $region3: #{tpu_custom_call.1} parent=1 // loop_header
      %s13 = sphi 0, %s17
      %p14 = scmp.ge.s32.totalorder %s13, 4
      %s20 = sphi 0, %s32
      %s21 = sphi 0, %s28
      %s22 = sphi 0, %s20
      %s23 = sphi 0, %s21
      %s24 = sphi 0, %s22
      %s25 = sphi 0, %s23
      %s37 = sphi 0, %s39
      %s40 = sphi 0, %s37
      %s41 = sphi 0, %s40
      %s57 = sphi 0, %s41
      %s69 = sphi 0, %s71
      %s72 = sphi 0, %s69
      %s73 = sphi 0, %s72
      %s89 = sphi 0, %s73
      %s93 = sphi 0, %s93
      %s95 = sphi 0, %s93
      %s96 = sphi 0, %s95
      %s110 = sphi 0, %s96
      %s114 = sphi 0, %s114
      %s116 = sphi 0, %s114
      %s117 = sphi 0, %s116
      %s131 = sphi 0, %s117
      %s139 = sphi 0, %s141
      %s142 = sphi 0, %s139
      %s143 = sphi 0, %s142
      %s159 = sphi 0, %s143
    $region4: #{tpu_custom_call.1} parent=1 // loop_header_branch
      %16 = sbr.rel (%p14) target = $region8
    $region5: #{tpu_custom_call.1} parent=1 // loop_body
      %s18 = ssub.s32 %s13, 1
      %s19 = ssub.s32 %s13, 2
      %s26 = sadd.s32 1, %s21
      %p27 = scmp.ge.s32.totalorder %s26, 1
      %s28 = scalar_select %p27, 0, %s26
      %s29 = sadd.s32 1, %s20
      %s30 = scalar_select %p27, %s29, %s20
      %p31 = scmp.ge.s32.totalorder %s30, 2
      %s32 = scalar_select %p31, 0, %s30
      %s33 = ssub.s32 %s20, %s32
      %s34 = ssub.s32 %s21, %s28
      %s35 = sor.u32 %s33, %s34
      %p36 = scmp.eq.s32.totalorder %s35, 0
      %s38 = sadd.s32 %s37, 1
      %s39 = scalar_select %p36, %s37, %s38
      %p42 = pneg %p36
      %p43 = scmp.eq.s32.totalorder %s13, 1
      %p44 = por %p42, %p43
      %p45 = scmp.ne.s32.totalorder %s37, %s40
      %p46 = scmp.eq.s32.totalorder %s13, 0
      %p47 = por %p45, %p46
      %p48 = scmp.ne.s32.totalorder %s37, %s40
      %p49 = scmp.eq.s32.totalorder %s18, 1
      %p50 = por %p48, %p49
      %p51 = scmp.ne.s32.totalorder %s40, %s41
      %p52 = scmp.eq.s32.totalorder %s18, 0
      %p53 = por %p51, %p52
      %p54 = scmp.ne.s32.totalorder %s40, %s41
      %p55 = scmp.eq.s32.totalorder %s19, 1
      %p56 = por %p54, %p55
      %p58 = scmp.ne.s32.totalorder %s41, %s57
      %p59 = scmp.eq.s32.totalorder %s19, 0
      %p60 = por %p58, %p59
      %s61 = sadd.s32 %s21, 1
      %s62 = smul.u32 %s61, 8
      %s63 = sadd.s32 %s28, 1
      %s64 = smul.u32 %s63, 8
      %s65 = ssub.s32 %s20, %s32
      %s66 = ssub.s32 %s62, %s64
      %s67 = sor.u32 %s65, %s66
      %p68 = scmp.eq.s32.totalorder %s67, 0
      %s70 = sadd.s32 %s69, 1
      %s71 = scalar_select %p68, %s69, %s70
      %p74 = pneg %p68
      %p75 = scmp.eq.s32.totalorder %s13, 1
      %p76 = por %p74, %p75
      %p77 = scmp.ne.s32.totalorder %s69, %s72
      %p78 = scmp.eq.s32.totalorder %s13, 0
      %p79 = por %p77, %p78
      %p80 = scmp.ne.s32.totalorder %s69, %s72
      %p81 = scmp.eq.s32.totalorder %s18, 1
      %p82 = por %p80, %p81
      %p83 = scmp.ne.s32.totalorder %s72, %s73
      %p84 = scmp.eq.s32.totalorder %s18, 0
      %p85 = por %p83, %p84
      %p86 = scmp.ne.s32.totalorder %s72, %s73
      %p87 = scmp.eq.s32.totalorder %s19, 1
      %p88 = por %p86, %p87
      %p90 = scmp.ne.s32.totalorder %s73, %s89
      %p91 = scmp.eq.s32.totalorder %s19, 0
      %p92 = por %p90, %p91
      %s94 = sadd.s32 %s93, 1
      %p97 = scmp.eq.s32.totalorder %s13, 1
      %p98 = scmp.ne.s32.totalorder %s93, %s95
      %p99 = scmp.eq.s32.totalorder %s13, 0
      %p100 = por %p98, %p99
      %p101 = scmp.ne.s32.totalorder %s93, %s95
      %p102 = scmp.eq.s32.totalorder %s18, 1
      %p103 = por %p101, %p102
      %p104 = scmp.ne.s32.totalorder %s95, %s96
      %p105 = scmp.eq.s32.totalorder %s18, 0
      %p106 = por %p104, %p105
      %p107 = scmp.ne.s32.totalorder %s95, %s96
      %p108 = scmp.eq.s32.totalorder %s19, 1
      %p109 = por %p107, %p108
      %p111 = scmp.ne.s32.totalorder %s96, %s110
      %p112 = scmp.eq.s32.totalorder %s19, 0
      %p113 = por %p111, %p112
      %s115 = sadd.s32 %s114, 1
      %p118 = scmp.eq.s32.totalorder %s13, 1
      %p119 = scmp.ne.s32.totalorder %s114, %s116
      %p120 = scmp.eq.s32.totalorder %s13, 0
      %p121 = por %p119, %p120
      %p122 = scmp.ne.s32.totalorder %s114, %s116
      %p123 = scmp.eq.s32.totalorder %s18, 1
      %p124 = por %p122, %p123
      %p125 = scmp.ne.s32.totalorder %s116, %s117
      %p126 = scmp.eq.s32.totalorder %s18, 0
      %p127 = por %p125, %p126
      %p128 = scmp.ne.s32.totalorder %s116, %s117
      %p129 = scmp.eq.s32.totalorder %s19, 1
      %p130 = por %p128, %p129
      %p132 = scmp.ne.s32.totalorder %s117, %s131
      %p133 = scmp.eq.s32.totalorder %s19, 0
      %p134 = por %p132, %p133
      %s135 = ssub.s32 %s20, %s32
      %s136 = ssub.s32 %s21, %s28
      %s137 = sor.u32 %s135, %s136
      %p138 = scmp.eq.s32.totalorder %s137, 0
      %s140 = sadd.s32 %s139, 1
      %s141 = scalar_select %p138, %s139, %s140
      %p144 = pneg %p138
      %p145 = scmp.eq.s32.totalorder %s13, 1
      %p146 = por %p144, %p145
      %p147 = scmp.ne.s32.totalorder %s139, %s142
      %p148 = scmp.eq.s32.totalorder %s13, 0
      %p149 = por %p147, %p148
      %p150 = scmp.ne.s32.totalorder %s139, %s142
      %p151 = scmp.eq.s32.totalorder %s18, 1
      %p152 = por %p150, %p151
      %p153 = scmp.ne.s32.totalorder %s142, %s143
      %p154 = scmp.eq.s32.totalorder %s18, 0
      %p155 = por %p153, %p154
      %p156 = scmp.ne.s32.totalorder %s142, %s143
      %p157 = scmp.eq.s32.totalorder %s19, 1
      %p158 = por %p156, %p157
      %p160 = scmp.ne.s32.totalorder %s143, %s159
      %p161 = scmp.eq.s32.totalorder %s19, 0
      %p162 = por %p160, %p161
      %p163 = scmp.le.s32.totalorder 1, %s13
      %p164 = scmp.lt.s32.totalorder %s13, 3
      %p165 = pnand %p163, %p164
      %p166 = pneg %p165
      // Predicated region
      $region9: #{tpu_custom_call.1} parent=5 // pred_check
        _
      $region10: #{tpu_custom_call.1} parent=5 // pred_check_branch
        %168 = sbr.rel (%p165) target = $region12
      $region11: #{tpu_custom_call.1} parent=5 // pred_region
        %s169 = ssub.s32 %s13, 1
        // Predicated region
        $region13: #{tpu_custom_call.1} parent=11 // pred_check
          %p170 = pneg %p106
        $region14: #{tpu_custom_call.1} parent=11 // pred_check_branch
          %172 = sbr.rel (%p170) target = $region16
        $region15: #{tpu_custom_call.1} parent=11 // pred_region
          _
        $region16: #{tpu_custom_call.1} parent=11 // pred_fallthru
          _
        // Predicated region
        $region17: #{tpu_custom_call.1} parent=11 // pred_check
          %p173 = pneg %p127
        $region18: #{tpu_custom_call.1} parent=11 // pred_check_branch
          %175 = sbr.rel (%p173) target = $region20
        $region19: #{tpu_custom_call.1} parent=11 // pred_region
          _
        $region20: #{tpu_custom_call.1} parent=11 // pred_fallthru
          _
      $region12: #{tpu_custom_call.1} parent=5 // pred_fallthru
        _
      %p176 = scmp.lt.s32.totalorder %s13, 2
      // Predicated region
      $region21: #{tpu_custom_call.1} parent=5 // pred_check
        %p177 = pneg %p176
      $region22: #{tpu_custom_call.1} parent=5 // pred_check_branch
        %179 = sbr.rel (%p177) target = $region24
      $region23: #{tpu_custom_call.1} parent=5 // pred_region
        // Predicated region
        $region25: #{tpu_custom_call.1} parent=23 // pred_check
          %p180 = pneg %p47
        $region26: #{tpu_custom_call.1} parent=23 // pred_check_branch
          %182 = sbr.rel (%p180) target = $region28
        $region27: #{tpu_custom_call.1} parent=23 // pred_region
          %s183 = smul.u32 16, %s21
          %s184 = ssub.s32 18, %s183
          %p185 = scmp.lt.s32.totalorder %s184, 16
          %s186 = scalar_select %p185, %s184, 16
          %s187 = smul.u32 128, %s186
          %s188 = smul.u32 %s187, 3
          %p189 = scmp.lt.s32.totalorder %s20, 1
          %s190 = scalar_select %p189, %s20, 1
          %p191 = scmp.lt.s32.totalorder %s183, 17
          %s192 = scalar_select %p191, %s183, 17
          %s193 = smul.addr %s192, 3
          %s194 = smul.addr %s190, 54
          %s195 = sadd.s32 %s193, %s194
          %s196 = smul.addr %s195, 8
          %s197 = scalar_lea.vmem %s0, %s196
          %s198 = smul.u32 16, %s21
          %s199 = ssub.s32 18, %s198
          %p200 = scmp.lt.s32.totalorder %s199, 16
          %s201 = scalar_select %p200, %s199, 16
          %s202 = smul.u32 128, %s201
          %s203 = smul.u32 %s202, 3
        $region28: #{tpu_custom_call.1} parent=23 // pred_fallthru
          _
        // Predicated region
        $region29: #{tpu_custom_call.1} parent=23 // pred_check
          %p204 = pneg %p79
        $region30: #{tpu_custom_call.1} parent=23 // pred_check_branch
          %206 = sbr.rel (%p204) target = $region32
        $region31: #{tpu_custom_call.1} parent=23 // pred_region
          %s207 = sadd.s32 %s21, 1
          %s208 = smul.u32 %s207, 8
          %s209 = smul.u32 2, %s208
          %p210 = scmp.lt.s32.totalorder %s20, 1
          %s211 = scalar_select %p210, %s20, 1
          %p212 = scmp.lt.s32.totalorder %s209, 17
          %s213 = scalar_select %p212, %s209, 17
          %s214 = smul.addr %s213, 3
          %s215 = smul.addr %s211, 54
          %s216 = sadd.s32 %s214, %s215
          %s217 = smul.addr %s216, 8
          %s218 = scalar_lea.vmem %s1, %s217
          %s219 = sadd.s32 %s21, 1
          %s220 = smul.u32 %s219, 8
          %s221 = smul.u32 2, %s220
        $region32: #{tpu_custom_call.1} parent=23 // pred_fallthru
          _
      $region24: #{tpu_custom_call.1} parent=5 // pred_fallthru
        _
      %p222 = scmp.le.s32.totalorder 1, %s13
      %p223 = scmp.lt.s32.totalorder %s13, 3
      %p224 = pnand %p222, %p223
      %p225 = pneg %p224
      // Predicated region
      $region33: #{tpu_custom_call.1} parent=5 // pred_check
        _
      $region34: #{tpu_custom_call.1} parent=5 // pred_check_branch
        %227 = sbr.rel (%p224) target = $region36
      $region35: #{tpu_custom_call.1} parent=5 // pred_region
        %s228 = ssub.s32 %s13, 1
        %s229 = smul.u32 16, %s23
        %s230 = ssub.s32 18, %s229
        %p231 = scmp.lt.s32.totalorder %s230, 16
        %s232 = scalar_select %p231, %s230, 16
        %s233 = smul.u32 128, %s232
        %s234 = smul.u32 %s233, 3
        %p235 = scmp.lt.s32.totalorder %s22, 1
        %s236 = scalar_select %p235, %s22, 1
        %p237 = scmp.lt.s32.totalorder %s229, 17
        %s238 = scalar_select %p237, %s229, 17
        %s239 = smul.addr %s238, 3
        %s240 = smul.addr %s236, 54
        %s241 = sadd.s32 %s239, %s240
        %s242 = smul.addr %s241, 8
        %s243 = scalar_lea.vmem %s0, %s242
        %p244 = pneg %p53
        %p245 = pneg %p50
        %s246 = sadd.s32 %s23, 1
        %s247 = smul.u32 %s246, 8
        %s248 = smul.u32 2, %s247
        %p249 = scmp.lt.s32.totalorder %s22, 1
        %s250 = scalar_select %p249, %s22, 1
        %p251 = scmp.lt.s32.totalorder %s248, 17
        %s252 = scalar_select %p251, %s248, 17
        %s253 = smul.addr %s252, 3
        %s254 = smul.addr %s250, 54
        %s255 = sadd.s32 %s253, %s254
        %s256 = smul.addr %s255, 8
        %s257 = scalar_lea.vmem %s1, %s256
        %p258 = pneg %p85
        %p259 = pneg %p82
        %p260 = pneg %p106
        %p261 = pneg %p103
        %p262 = pneg %p127
        %p263 = pneg %p124
        %p264 = pneg %p155
        %p265 = pneg %p152
        %s266 = sand.u32 %s142, 1
        %s267 = scalar_lea.sflag [#allocation4], %s266
        %s268 = sand.u32 %s142, 1
        %s269 = smul.addr %s268, 256
        %s270 = scalar_lea.vmem [#allocation3], %s269
        %s271 = smul.u32 16, %s23
        %s272 = ssub.s32 18, %s271
        %p273 = scmp.lt.s32.totalorder %s272, 16
        %s274 = scalar_select %p273, %s272, 16
        %s275 = smul.u32 128, %s274
        %s276 = smul.u32 %s275, 3
        %p277 = scmp.lt.s32.totalorder %s22, 1
        %s278 = scalar_select %p277, %s22, 1
        %p279 = scmp.lt.s32.totalorder %s271, 17
        %s280 = scalar_select %p279, %s271, 17
        %s281 = smul.addr %s280, 3
        %s282 = smul.addr %s278, 54
        %s283 = sadd.s32 %s281, %s282
        %s284 = smul.addr %s283, 8
        %s285 = scalar_lea.vmem %s0, %s284
        %s286 = smul.u32 16, %s23
        %s287 = ssub.s32 18, %s286
        %p288 = scmp.lt.s32.totalorder %s287, 16
        %s289 = scalar_select %p288, %s287, 16
        %s290 = smul.u32 128, %s289
        %s291 = smul.u32 %s290, 3
        %s292 = sadd.s32 %s23, 1
        %s293 = smul.u32 %s292, 8
        %s294 = smul.u32 2, %s293
        %p295 = scmp.lt.s32.totalorder %s22, 1
        %s296 = scalar_select %p295, %s22, 1
        %p297 = scmp.lt.s32.totalorder %s294, 17
        %s298 = scalar_select %p297, %s294, 17
        %s299 = smul.addr %s298, 3
        %s300 = smul.addr %s296, 54
        %s301 = sadd.s32 %s299, %s300
        %s302 = smul.addr %s301, 8
        %s303 = scalar_lea.vmem %s1, %s302
        %s304 = sadd.s32 %s23, 1
        %s305 = smul.u32 %s304, 8
        %s306 = smul.u32 2, %s305
        %s307 = smul.u32 16, %s23
        %v308 = vld [vmem:[%s285] sm:$0xff]
        %v309 = vld [vmem:[%s285 + $0x8] sm:$0xff]
        %v310 = vld [vmem:[%s285 + $0x10] sm:$0x3]
        %v311 = vld [vmem:[%s285 + $0x18] sm:$0xff]
        %v312 = vld [vmem:[%s285 + $0x20] sm:$0xff]
        %v313 = vld [vmem:[%s285 + $0x28] sm:$0x3]
        %v314 = vld [vmem:[%s285 + $0x30] sm:$0xff]
        %v315 = vld [vmem:[%s285 + $0x38] sm:$0xff]
        %v316 = vld [vmem:[%s285 + $0x40] sm:$0x3]
        %v317 = vld [vmem:[%s285 + $0x48] sm:$0xff]
        %v318 = vld [vmem:[%s285 + $0x50] sm:$0xff]
        %v319 = vld [vmem:[%s285 + $0x58] sm:$0x3]
        %v320 = vld [vmem:[%s285 + $0x60] sm:$0xff]
        %v321 = vld [vmem:[%s285 + $0x68] sm:$0xff]
        %v322 = vld [vmem:[%s285 + $0x70] sm:$0x3]
        %v323 = vld [vmem:[%s285 + $0x78] sm:$0xff]
        %v324 = vld [vmem:[%s285 + $0x80] sm:$0xff]
        %v325 = vld [vmem:[%s285 + $0x88] sm:$0x3]
        %v326 = vld [vmem:[%s285 + $0x90] sm:$0xff]
        %v327 = vld [vmem:[%s285 + $0x98] sm:$0xff]
        %v328 = vld [vmem:[%s285 + $0xa0] sm:$0x3]
        %v329 = vld [vmem:[%s285 + $0xa8] sm:$0xff]
        %v330 = vld [vmem:[%s285 + $0xb0] sm:$0xff]
        %v331 = vld [vmem:[%s285 + $0xb8] sm:$0x3]
        %v332 = vld [vmem:[%s285 + $0xc0] sm:$0xff]
        %v333 = vld [vmem:[%s285 + $0xc8] sm:$0xff]
        %v334 = vld [vmem:[%s285 + $0xd0] sm:$0x3]
        %v335 = vld [vmem:[%s285 + $0xd8] sm:$0xff]
        %v336 = vld [vmem:[%s285 + $0xe0] sm:$0xff]
        %v337 = vld [vmem:[%s285 + $0xe8] sm:$0x3]
        %v338 = vld [vmem:[%s285 + $0xf0] sm:$0xff]
        %v339 = vld [vmem:[%s285 + $0xf8] sm:$0xff]
        %v340 = vld [vmem:[%s285 + $0x100] sm:$0x3]
        %v341 = vld [vmem:[%s285 + $0x108] sm:$0xff]
        %v342 = vld [vmem:[%s285 + $0x110] sm:$0xff]
        %v343 = vld [vmem:[%s285 + $0x118] sm:$0x3]
        %v344 = vld [vmem:[%s285 + $0x120] sm:$0xff]
        %v345 = vld [vmem:[%s285 + $0x128] sm:$0xff]
        %v346 = vld [vmem:[%s285 + $0x130] sm:$0x3]
        %v347 = vld [vmem:[%s285 + $0x138] sm:$0xff]
        %v348 = vld [vmem:[%s285 + $0x140] sm:$0xff]
        %v349 = vld [vmem:[%s285 + $0x148] sm:$0x3]
        %v350 = vld [vmem:[%s285 + $0x150] sm:$0xff]
        %v351 = vld [vmem:[%s285 + $0x158] sm:$0xff]
        %v352 = vld [vmem:[%s285 + $0x160] sm:$0x3]
        %v353 = vld [vmem:[%s285 + $0x168] sm:$0xff]
        %v354 = vld [vmem:[%s285 + $0x170] sm:$0xff]
        %v355 = vld [vmem:[%s285 + $0x178] sm:$0x3]
        %356 = vst [vmem:[#allocation2] sm:$0xff] %v308
        %357 = vst [vmem:[#allocation2 + $0x8] sm:$0xff] %v309
        %358 = vst [vmem:[#allocation2 + $0x10] sm:$0x3] %v310
        %359 = vst [vmem:[#allocation2 + $0x18] sm:$0xff] %v311
        %360 = vst [vmem:[#allocation2 + $0x20] sm:$0xff] %v312
        %361 = vst [vmem:[#allocation2 + $0x28] sm:$0x3] %v313
        %362 = vst [vmem:[#allocation2 + $0x30] sm:$0xff] %v314
        %363 = vst [vmem:[#allocation2 + $0x38] sm:$0xff] %v315
        %364 = vst [vmem:[#allocation2 + $0x40] sm:$0x3] %v316
        %365 = vst [vmem:[#allocation2 + $0x48] sm:$0xff] %v317
        %366 = vst [vmem:[#allocation2 + $0x50] sm:$0xff] %v318
        %367 = vst [vmem:[#allocation2 + $0x58] sm:$0x3] %v319
        %368 = vst [vmem:[#allocation2 + $0x60] sm:$0xff] %v320
        %369 = vst [vmem:[#allocation2 + $0x68] sm:$0xff] %v321
        %370 = vst [vmem:[#allocation2 + $0x70] sm:$0x3] %v322
        %371 = vst [vmem:[#allocation2 + $0x78] sm:$0xff] %v323
        %372 = vst [vmem:[#allocation2 + $0x80] sm:$0xff] %v324
        %373 = vst [vmem:[#allocation2 + $0x88] sm:$0x3] %v325
        %374 = vst [vmem:[#allocation2 + $0x90] sm:$0xff] %v326
        %375 = vst [vmem:[#allocation2 + $0x98] sm:$0xff] %v327
        %376 = vst [vmem:[#allocation2 + $0xa0] sm:$0x3] %v328
        %377 = vst [vmem:[#allocation2 + $0xa8] sm:$0xff] %v329
        %378 = vst [vmem:[#allocation2 + $0xb0] sm:$0xff] %v330
        %379 = vst [vmem:[#allocation2 + $0xb8] sm:$0x3] %v331
        %380 = vst [vmem:[#allocation2 + $0xc0] sm:$0xff] %v332
        %381 = vst [vmem:[#allocation2 + $0xc8] sm:$0xff] %v333
        %382 = vst [vmem:[#allocation2 + $0xd0] sm:$0x3] %v334
        %383 = vst [vmem:[#allocation2 + $0xd8] sm:$0xff] %v335
        %384 = vst [vmem:[#allocation2 + $0xe0] sm:$0xff] %v336
        %385 = vst [vmem:[#allocation2 + $0xe8] sm:$0x3] %v337
        %386 = vst [vmem:[#allocation2 + $0xf0] sm:$0xff] %v338
        %387 = vst [vmem:[#allocation2 + $0xf8] sm:$0xff] %v339
        %388 = vst [vmem:[#allocation2 + $0x100] sm:$0x3] %v340
        %389 = vst [vmem:[#allocation2 + $0x108] sm:$0xff] %v341
        %390 = vst [vmem:[#allocation2 + $0x110] sm:$0xff] %v342
        %391 = vst [vmem:[#allocation2 + $0x118] sm:$0x3] %v343
        %392 = vst [vmem:[#allocation2 + $0x120] sm:$0xff] %v344
        %393 = vst [vmem:[#allocation2 + $0x128] sm:$0xff] %v345
        %394 = vst [vmem:[#allocation2 + $0x130] sm:$0x3] %v346
        %395 = vst [vmem:[#allocation2 + $0x138] sm:$0xff] %v347
        %396 = vst [vmem:[#allocation2 + $0x140] sm:$0xff] %v348
        %397 = vst [vmem:[#allocation2 + $0x148] sm:$0x3] %v349
        %398 = vst [vmem:[#allocation2 + $0x150] sm:$0xff] %v350
        %399 = vst [vmem:[#allocation2 + $0x158] sm:$0xff] %v351
        %400 = vst [vmem:[#allocation2 + $0x160] sm:$0x3] %v352
        %401 = vst [vmem:[#allocation2 + $0x168] sm:$0xff] %v353
        %402 = vst [vmem:[#allocation2 + $0x170] sm:$0xff] %v354
        %403 = vst [vmem:[#allocation2 + $0x178] sm:$0x3] %v355
        %v404 = vld [vmem:[%s303] sm:$0xff]
        %v405 = vld [vmem:[%s303 + $0x8] sm:$0xff]
        %v406 = vld [vmem:[%s303 + $0x10] sm:$0x3]
        %v407 = vld [vmem:[%s303 + $0x18] sm:$0xff]
        %v408 = vld [vmem:[%s303 + $0x20] sm:$0xff]
        %v409 = vld [vmem:[%s303 + $0x28] sm:$0x3]
        %s410 = scalar_lea.vmem [#allocation2], 384
        %411 = vst [vmem:[%s410] sm:$0xff] %v404
        %412 = vst [vmem:[%s410 + $0x8] sm:$0xff] %v405
        %413 = vst [vmem:[%s410 + $0x10] sm:$0x3] %v406
        %414 = vst [vmem:[%s410 + $0x18] sm:$0xff] %v407
        %415 = vst [vmem:[%s410 + $0x20] sm:$0xff] %v408
        %416 = vst [vmem:[%s410 + $0x28] sm:$0x3] %v409
        %v417 = vld [vmem:[%s2] sm:$0xff]
        %v418 = vld [vmem:[%s2 + $0x8] sm:$0x1]
        %v419 = vld [vmem:[#allocation2] sm:$0xff]
        %v420 = vld [vmem:[#allocation2 + $0x8] sm:$0xff]
        %v421 = vld [vmem:[#allocation2 + $0x18] sm:$0xff]
        %v422 = vld [vmem:[#allocation2 + $0x20] sm:$0xff]
        %v423 = vld [vmem:[#allocation2 + $0x30] sm:$0xff]
        %v424 = vld [vmem:[#allocation2 + $0x38] sm:$0xff]
        %v425 = vld [vmem:[#allocation2 + $0x48] sm:$0xff]
        %v426 = vld [vmem:[#allocation2 + $0x50] sm:$0xff]
        %v427 = vld [vmem:[#allocation2 + $0x60] sm:$0xff]
        %v428 = vld [vmem:[#allocation2 + $0x68] sm:$0xff]
        %v429 = vld [vmem:[#allocation2 + $0x78] sm:$0xff]
        %v430 = vld [vmem:[#allocation2 + $0x80] sm:$0xff]
        %v431 = vld [vmem:[#allocation2 + $0x90] sm:$0xff]
        %v432 = vld [vmem:[#allocation2 + $0x98] sm:$0xff]
        %v433 = vld [vmem:[#allocation2 + $0xa8] sm:$0xff]
        %v434 = vld [vmem:[#allocation2 + $0xb0] sm:$0xff]
        %v435 = vld [vmem:[#allocation2 + $0xc0] sm:$0xff]
        %v436 = vld [vmem:[#allocation2 + $0xc8] sm:$0xff]
        %v437 = vld [vmem:[#allocation2 + $0xd8] sm:$0xff]
        %v438 = vld [vmem:[#allocation2 + $0xe0] sm:$0xff]
        %v439 = vld [vmem:[#allocation2 + $0xf0] sm:$0xff]
        %v440 = vld [vmem:[#allocation2 + $0xf8] sm:$0xff]
        %v441 = vld [vmem:[#allocation2 + $0x108] sm:$0xff]
        %v442 = vld [vmem:[#allocation2 + $0x110] sm:$0xff]
        %v443 = vld [vmem:[#allocation2 + $0x120] sm:$0xff]
        %v444 = vld [vmem:[#allocation2 + $0x128] sm:$0xff]
        %v445 = vld [vmem:[#allocation2 + $0x138] sm:$0xff]
        %v446 = vld [vmem:[#allocation2 + $0x140] sm:$0xff]
        %v447 = vld [vmem:[#allocation2 + $0x150] sm:$0xff]
        %v448 = vld [vmem:[#allocation2 + $0x158] sm:$0xff]
        %v449 = vld [vmem:[#allocation2 + $0x168] sm:$0xff]
        %v450 = vld [vmem:[#allocation2 + $0x170] sm:$0xff]
        %v451 = vld [vmem:[#allocation2 + $0x180] sm:$0xff]
        %v452 = vld [vmem:[#allocation2 + $0x188] sm:$0xff]
        %v453 = vld [vmem:[#allocation2 + $0x198] sm:$0xff]
        %v454 = vld [vmem:[#allocation2 + $0x1a0] sm:$0xff]
        %v455 = vlaneseq
        %v456 = vshrl.u32 %v455, 7
        %v457 = vsub.s32 0, %v456
        %v458 = vrot.slane %v417, %v457
        %v459 = vmul.f32 %v419, %v458
        %v460 = vmul.f32 %v420, %v458
        %v461 = vmul.f32 %v421, %v458
        %v462 = vmul.f32 %v422, %v458
        %v463 = vmul.f32 %v423, %v458
        %v464 = vmul.f32 %v424, %v458
        %v465 = vmul.f32 %v425, %v458
        %v466 = vmul.f32 %v426, %v458
        %v467 = vmul.f32 %v427, %v458
        %v468 = vmul.f32 %v428, %v458
        %v469 = vmul.f32 %v429, %v458
        %v470 = vmul.f32 %v430, %v458
        %v471 = vmul.f32 %v431, %v458
        %v472 = vmul.f32 %v432, %v458
        %v473 = vmul.f32 %v433, %v458
        %v474 = vmul.f32 %v434, %v458
        %v475 = vmul.f32 %v435, %v458
        %v476 = vmul.f32 %v436, %v458
        %v477 = vmul.f32 %v437, %v458
        %v478 = vmul.f32 %v438, %v458
        %v479 = vmul.f32 %v439, %v458
        %v480 = vmul.f32 %v440, %v458
        %v481 = vmul.f32 %v441, %v458
        %v482 = vmul.f32 %v442, %v458
        %v483 = vmul.f32 %v443, %v458
        %v484 = vmul.f32 %v444, %v458
        %v485 = vmul.f32 %v445, %v458
        %v486 = vmul.f32 %v446, %v458
        %v487 = vmul.f32 %v447, %v458
        %v488 = vmul.f32 %v448, %v458
        %v489 = vmul.f32 %v449, %v458
        %v490 = vmul.f32 %v450, %v458
        %v491 = vadd.f32 %v459, 0.0
        %v492 = vadd.f32 %v460, 0.0
        %v493 = vadd.f32 %v461, 0.0
        %v494 = vadd.f32 %v462, 0.0
        %v495 = vadd.f32 %v463, 0.0
        %v496 = vadd.f32 %v464, 0.0
        %v497 = vadd.f32 %v465, 0.0
        %v498 = vadd.f32 %v466, 0.0
        %v499 = vadd.f32 %v467, 0.0
        %v500 = vadd.f32 %v468, 0.0
        %v501 = vadd.f32 %v469, 0.0
        %v502 = vadd.f32 %v470, 0.0
        %v503 = vadd.f32 %v471, 0.0
        %v504 = vadd.f32 %v472, 0.0
        %v505 = vadd.f32 %v473, 0.0
        %v506 = vadd.f32 %v474, 0.0
        %v507 = vadd.f32 %v475, 0.0
        %v508 = vadd.f32 %v476, 0.0
        %v509 = vadd.f32 %v477, 0.0
        %v510 = vadd.f32 %v478, 0.0
        %v511 = vadd.f32 %v479, 0.0
        %v512 = vadd.f32 %v480, 0.0
        %v513 = vadd.f32 %v481, 0.0
        %v514 = vadd.f32 %v482, 0.0
        %v515 = vadd.f32 %v483, 0.0
        %v516 = vadd.f32 %v484, 0.0
        %v517 = vadd.f32 %v485, 0.0
        %v518 = vadd.f32 %v486, 0.0
        %v519 = vadd.f32 %v487, 0.0
        %v520 = vadd.f32 %v488, 0.0
        %v521 = vadd.f32 %v489, 0.0
        %v522 = vadd.f32 %v490, 0.0
        %v523 = vlaneseq
        %v524 = vshrl.u32 %v523, 7
        %v525 = vsub.s32 3, %v524
        %v526 = vrot.slane %v417, %v525
        %v527 = vmul.f32 %v421, %v526
        %v528 = vmul.f32 %v422, %v526
        %v529 = vmul.f32 %v423, %v526
        %v530 = vmul.f32 %v424, %v526
        %v531 = vmul.f32 %v425, %v526
        %v532 = vmul.f32 %v426, %v526
        %v533 = vmul.f32 %v427, %v526
        %v534 = vmul.f32 %v428, %v526
        %v535 = vmul.f32 %v429, %v526
        %v536 = vmul.f32 %v430, %v526
        %v537 = vmul.f32 %v431, %v526
        %v538 = vmul.f32 %v432, %v526
        %v539 = vmul.f32 %v433, %v526
        %v540 = vmul.f32 %v434, %v526
        %v541 = vmul.f32 %v435, %v526
        %v542 = vmul.f32 %v436, %v526
        %v543 = vmul.f32 %v437, %v526
        %v544 = vmul.f32 %v438, %v526
        %v545 = vmul.f32 %v439, %v526
        %v546 = vmul.f32 %v440, %v526
        %v547 = vmul.f32 %v441, %v526
        %v548 = vmul.f32 %v442, %v526
        %v549 = vmul.f32 %v443, %v526
        %v550 = vmul.f32 %v444, %v526
        %v551 = vmul.f32 %v445, %v526
        %v552 = vmul.f32 %v446, %v526
        %v553 = vmul.f32 %v447, %v526
        %v554 = vmul.f32 %v448, %v526
        %v555 = vmul.f32 %v449, %v526
        %v556 = vmul.f32 %v450, %v526
        %v557 = vmul.f32 %v451, %v526
        %v558 = vmul.f32 %v452, %v526
        %v559 = vadd.f32 %v491, %v527
        %v560 = vadd.f32 %v492, %v528
        %v561 = vadd.f32 %v493, %v529
        %v562 = vadd.f32 %v494, %v530
        %v563 = vadd.f32 %v495, %v531
        %v564 = vadd.f32 %v496, %v532
        %v565 = vadd.f32 %v497, %v533
        %v566 = vadd.f32 %v498, %v534
        %v567 = vadd.f32 %v499, %v535
        %v568 = vadd.f32 %v500, %v536
        %v569 = vadd.f32 %v501, %v537
        %v570 = vadd.f32 %v502, %v538
        %v571 = vadd.f32 %v503, %v539
        %v572 = vadd.f32 %v504, %v540
        %v573 = vadd.f32 %v505, %v541
        %v574 = vadd.f32 %v506, %v542
        %v575 = vadd.f32 %v507, %v543
        %v576 = vadd.f32 %v508, %v544
        %v577 = vadd.f32 %v509, %v545
        %v578 = vadd.f32 %v510, %v546
        %v579 = vadd.f32 %v511, %v547
        %v580 = vadd.f32 %v512, %v548
        %v581 = vadd.f32 %v513, %v549
        %v582 = vadd.f32 %v514, %v550
        %v583 = vadd.f32 %v515, %v551
        %v584 = vadd.f32 %v516, %v552
        %v585 = vadd.f32 %v517, %v553
        %v586 = vadd.f32 %v518, %v554
        %v587 = vadd.f32 %v519, %v555
        %v588 = vadd.f32 %v520, %v556
        %v589 = vadd.f32 %v521, %v557
        %v590 = vadd.f32 %v522, %v558
        %v591 = vlaneseq
        %v592 = vshrl.u32 %v591, 7
        %v593 = vsub.s32 6, %v592
        %v594 = vrot.slane %v417, %v593
        %v595 = vmul.f32 %v423, %v594
        %v596 = vmul.f32 %v424, %v594
        %v597 = vmul.f32 %v425, %v594
        %v598 = vmul.f32 %v426, %v594
        %v599 = vmul.f32 %v427, %v594
        %v600 = vmul.f32 %v428, %v594
        %v601 = vmul.f32 %v429, %v594
        %v602 = vmul.f32 %v430, %v594
        %v603 = vmul.f32 %v431, %v594
        %v604 = vmul.f32 %v432, %v594
        %v605 = vmul.f32 %v433, %v594
        %v606 = vmul.f32 %v434, %v594
        %v607 = vmul.f32 %v435, %v594
        %v608 = vmul.f32 %v436, %v594
        %v609 = vmul.f32 %v437, %v594
        %v610 = vmul.f32 %v438, %v594
        %v611 = vmul.f32 %v439, %v594
        %v612 = vmul.f32 %v440, %v594
        %v613 = vmul.f32 %v441, %v594
        %v614 = vmul.f32 %v442, %v594
        %v615 = vmul.f32 %v443, %v594
        %v616 = vmul.f32 %v444, %v594
        %v617 = vmul.f32 %v445, %v594
        %v618 = vmul.f32 %v446, %v594
        %v619 = vmul.f32 %v447, %v594
        %v620 = vmul.f32 %v448, %v594
        %v621 = vmul.f32 %v449, %v594
        %v622 = vmul.f32 %v450, %v594
        %v623 = vmul.f32 %v451, %v594
        %v624 = vmul.f32 %v452, %v594
        %v625 = vmul.f32 %v453, %v594
        %v626 = vmul.f32 %v454, %v594
        %v627 = vadd.f32 %v559, %v595
        %v628 = vadd.f32 %v560, %v596
        %v629 = vadd.f32 %v561, %v597
        %v630 = vadd.f32 %v562, %v598
        %v631 = vadd.f32 %v563, %v599
        %v632 = vadd.f32 %v564, %v600
        %v633 = vadd.f32 %v565, %v601
        %v634 = vadd.f32 %v566, %v602
        %v635 = vadd.f32 %v567, %v603
        %v636 = vadd.f32 %v568, %v604
        %v637 = vadd.f32 %v569, %v605
        %v638 = vadd.f32 %v570, %v606
        %v639 = vadd.f32 %v571, %v607
        %v640 = vadd.f32 %v572, %v608
        %v641 = vadd.f32 %v573, %v609
        %v642 = vadd.f32 %v574, %v610
        %v643 = vadd.f32 %v575, %v611
        %v644 = vadd.f32 %v576, %v612
        %v645 = vadd.f32 %v577, %v613
        %v646 = vadd.f32 %v578, %v614
        %v647 = vadd.f32 %v579, %v615
        %v648 = vadd.f32 %v580, %v616
        %v649 = vadd.f32 %v581, %v617
        %v650 = vadd.f32 %v582, %v618
        %v651 = vadd.f32 %v583, %v619
        %v652 = vadd.f32 %v584, %v620
        %v653 = vadd.f32 %v585, %v621
        %v654 = vadd.f32 %v586, %v622
        %v655 = vadd.f32 %v587, %v623
        %v656 = vadd.f32 %v588, %v624
        %v657 = vadd.f32 %v589, %v625
        %v658 = vadd.f32 %v590, %v626
        %v659 = vld [vmem:[#allocation2 + $0x1] sm:$0xff]
        %v660 = vld [vmem:[#allocation2 + $0x9] sm:$0xff]
        %v661 = vld [vmem:[#allocation2 + $0x19] sm:$0xff]
        %v662 = vld [vmem:[#allocation2 + $0x21] sm:$0xff]
        %v663 = vld [vmem:[#allocation2 + $0x31] sm:$0xff]
        %v664 = vld [vmem:[#allocation2 + $0x39] sm:$0xff]
        %v665 = vld [vmem:[#allocation2 + $0x49] sm:$0xff]
        %v666 = vld [vmem:[#allocation2 + $0x51] sm:$0xff]
        %v667 = vld [vmem:[#allocation2 + $0x61] sm:$0xff]
        %v668 = vld [vmem:[#allocation2 + $0x69] sm:$0xff]
        %v669 = vld [vmem:[#allocation2 + $0x79] sm:$0xff]
        %v670 = vld [vmem:[#allocation2 + $0x81] sm:$0xff]
        %v671 = vld [vmem:[#allocation2 + $0x91] sm:$0xff]
        %v672 = vld [vmem:[#allocation2 + $0x99] sm:$0xff]
        %v673 = vld [vmem:[#allocation2 + $0xa9] sm:$0xff]
        %v674 = vld [vmem:[#allocation2 + $0xb1] sm:$0xff]
        %v675 = vld [vmem:[#allocation2 + $0xc1] sm:$0xff]
        %v676 = vld [vmem:[#allocation2 + $0xc9] sm:$0xff]
        %v677 = vld [vmem:[#allocation2 + $0xd9] sm:$0xff]
        %v678 = vld [vmem:[#allocation2 + $0xe1] sm:$0xff]
        %v679 = vld [vmem:[#allocation2 + $0xf1] sm:$0xff]
        %v680 = vld [vmem:[#allocation2 + $0xf9] sm:$0xff]
        %v681 = vld [vmem:[#allocation2 + $0x109] sm:$0xff]
        %v682 = vld [vmem:[#allocation2 + $0x111] sm:$0xff]
        %v683 = vld [vmem:[#allocation2 + $0x121] sm:$0xff]
        %v684 = vld [vmem:[#allocation2 + $0x129] sm:$0xff]
        %v685 = vld [vmem:[#allocation2 + $0x139] sm:$0xff]
        %v686 = vld [vmem:[#allocation2 + $0x141] sm:$0xff]
        %v687 = vld [vmem:[#allocation2 + $0x151] sm:$0xff]
        %v688 = vld [vmem:[#allocation2 + $0x159] sm:$0xff]
        %v689 = vld [vmem:[#allocation2 + $0x169] sm:$0xff]
        %v690 = vld [vmem:[#allocation2 + $0x171] sm:$0xff]
        %v691 = vld [vmem:[#allocation2 + $0x181] sm:$0xff]
        %v692 = vld [vmem:[#allocation2 + $0x189] sm:$0xff]
        %v693 = vld [vmem:[#allocation2 + $0x199] sm:$0xff]
        %v694 = vld [vmem:[#allocation2 + $0x1a1] sm:$0xff]
        %v695 = vlaneseq
        %v696 = vshrl.u32 %v695, 7
        %v697 = vsub.s32 1, %v696
        %v698 = vrot.slane %v417, %v697
        %v699 = vmul.f32 %v659, %v698
        %v700 = vmul.f32 %v660, %v698
        %v701 = vmul.f32 %v661, %v698
        %v702 = vmul.f32 %v662, %v698
        %v703 = vmul.f32 %v663, %v698
        %v704 = vmul.f32 %v664, %v698
        %v705 = vmul.f32 %v665, %v698
        %v706 = vmul.f32 %v666, %v698
        %v707 = vmul.f32 %v667, %v698
        %v708 = vmul.f32 %v668, %v698
        %v709 = vmul.f32 %v669, %v698
        %v710 = vmul.f32 %v670, %v698
        %v711 = vmul.f32 %v671, %v698
        %v712 = vmul.f32 %v672, %v698
        %v713 = vmul.f32 %v673, %v698
        %v714 = vmul.f32 %v674, %v698
        %v715 = vmul.f32 %v675, %v698
        %v716 = vmul.f32 %v676, %v698
        %v717 = vmul.f32 %v677, %v698
        %v718 = vmul.f32 %v678, %v698
        %v719 = vmul.f32 %v679, %v698
        %v720 = vmul.f32 %v680, %v698
        %v721 = vmul.f32 %v681, %v698
        %v722 = vmul.f32 %v682, %v698
        %v723 = vmul.f32 %v683, %v698
        %v724 = vmul.f32 %v684, %v698
        %v725 = vmul.f32 %v685, %v698
        %v726 = vmul.f32 %v686, %v698
        %v727 = vmul.f32 %v687, %v698
        %v728 = vmul.f32 %v688, %v698
        %v729 = vmul.f32 %v689, %v698
        %v730 = vmul.f32 %v690, %v698
        %v731 = vadd.f32 %v627, %v699
        %v732 = vadd.f32 %v628, %v700
        %v733 = vadd.f32 %v629, %v701
        %v734 = vadd.f32 %v630, %v702
        %v735 = vadd.f32 %v631, %v703
        %v736 = vadd.f32 %v632, %v704
        %v737 = vadd.f32 %v633, %v705
        %v738 = vadd.f32 %v634, %v706
        %v739 = vadd.f32 %v635, %v707
        %v740 = vadd.f32 %v636, %v708
        %v741 = vadd.f32 %v637, %v709
        %v742 = vadd.f32 %v638, %v710
        %v743 = vadd.f32 %v639, %v711
        %v744 = vadd.f32 %v640, %v712
        %v745 = vadd.f32 %v641, %v713
        %v746 = vadd.f32 %v642, %v714
        %v747 = vadd.f32 %v643, %v715
        %v748 = vadd.f32 %v644, %v716
        %v749 = vadd.f32 %v645, %v717
        %v750 = vadd.f32 %v646, %v718
        %v751 = vadd.f32 %v647, %v719
        %v752 = vadd.f32 %v648, %v720
        %v753 = vadd.f32 %v649, %v721
        %v754 = vadd.f32 %v650, %v722
        %v755 = vadd.f32 %v651, %v723
        %v756 = vadd.f32 %v652, %v724
        %v757 = vadd.f32 %v653, %v725
        %v758 = vadd.f32 %v654, %v726
        %v759 = vadd.f32 %v655, %v727
        %v760 = vadd.f32 %v656, %v728
        %v761 = vadd.f32 %v657, %v729
        %v762 = vadd.f32 %v658, %v730
        %v763 = vlaneseq
        %v764 = vshrl.u32 %v763, 7
        %v765 = vsub.s32 4, %v764
        %v766 = vrot.slane %v417, %v765
        %v767 = vmul.f32 %v661, %v766
        %v768 = vmul.f32 %v662, %v766
        %v769 = vmul.f32 %v663, %v766
        %v770 = vmul.f32 %v664, %v766
        %v771 = vmul.f32 %v665, %v766
        %v772 = vmul.f32 %v666, %v766
        %v773 = vmul.f32 %v667, %v766
        %v774 = vmul.f32 %v668, %v766
        %v775 = vmul.f32 %v669, %v766
        %v776 = vmul.f32 %v670, %v766
        %v777 = vmul.f32 %v671, %v766
        %v778 = vmul.f32 %v672, %v766
        %v779 = vmul.f32 %v673, %v766
        %v780 = vmul.f32 %v674, %v766
        %v781 = vmul.f32 %v675, %v766
        %v782 = vmul.f32 %v676, %v766
        %v783 = vmul.f32 %v677, %v766
        %v784 = vmul.f32 %v678, %v766
        %v785 = vmul.f32 %v679, %v766
        %v786 = vmul.f32 %v680, %v766
        %v787 = vmul.f32 %v681, %v766
        %v788 = vmul.f32 %v682, %v766
        %v789 = vmul.f32 %v683, %v766
        %v790 = vmul.f32 %v684, %v766
        %v791 = vmul.f32 %v685, %v766
        %v792 = vmul.f32 %v686, %v766
        %v793 = vmul.f32 %v687, %v766
        %v794 = vmul.f32 %v688, %v766
        %v795 = vmul.f32 %v689, %v766
        %v796 = vmul.f32 %v690, %v766
        %v797 = vmul.f32 %v691, %v766
        %v798 = vmul.f32 %v692, %v766
        %v799 = vadd.f32 %v731, %v767
        %v800 = vadd.f32 %v732, %v768
        %v801 = vadd.f32 %v733, %v769
        %v802 = vadd.f32 %v734, %v770
        %v803 = vadd.f32 %v735, %v771
        %v804 = vadd.f32 %v736, %v772
        %v805 = vadd.f32 %v737, %v773
        %v806 = vadd.f32 %v738, %v774
        %v807 = vadd.f32 %v739, %v775
        %v808 = vadd.f32 %v740, %v776
        %v809 = vadd.f32 %v741, %v777
        %v810 = vadd.f32 %v742, %v778
        %v811 = vadd.f32 %v743, %v779
        %v812 = vadd.f32 %v744, %v780
        %v813 = vadd.f32 %v745, %v781
        %v814 = vadd.f32 %v746, %v782
        %v815 = vadd.f32 %v747, %v783
        %v816 = vadd.f32 %v748, %v784
        %v817 = vadd.f32 %v749, %v785
        %v818 = vadd.f32 %v750, %v786
        %v819 = vadd.f32 %v751, %v787
        %v820 = vadd.f32 %v752, %v788
        %v821 = vadd.f32 %v753, %v789
        %v822 = vadd.f32 %v754, %v790
        %v823 = vadd.f32 %v755, %v791
        %v824 = vadd.f32 %v756, %v792
        %v825 = vadd.f32 %v757, %v793
        %v826 = vadd.f32 %v758, %v794
        %v827 = vadd.f32 %v759, %v795
        %v828 = vadd.f32 %v760, %v796
        %v829 = vadd.f32 %v761, %v797
        %v830 = vadd.f32 %v762, %v798
        %v831 = vlaneseq
        %v832 = vshrl.u32 %v831, 7
        %v833 = vsub.s32 7, %v832
        %v834 = vrot.slane %v417, %v833
        %v835 = vmul.f32 %v663, %v834
        %v836 = vmul.f32 %v664, %v834
        %v837 = vmul.f32 %v665, %v834
        %v838 = vmul.f32 %v666, %v834
        %v839 = vmul.f32 %v667, %v834
        %v840 = vmul.f32 %v668, %v834
        %v841 = vmul.f32 %v669, %v834
        %v842 = vmul.f32 %v670, %v834
        %v843 = vmul.f32 %v671, %v834
        %v844 = vmul.f32 %v672, %v834
        %v845 = vmul.f32 %v673, %v834
        %v846 = vmul.f32 %v674, %v834
        %v847 = vmul.f32 %v675, %v834
        %v848 = vmul.f32 %v676, %v834
        %v849 = vmul.f32 %v677, %v834
        %v850 = vmul.f32 %v678, %v834
        %v851 = vmul.f32 %v679, %v834
        %v852 = vmul.f32 %v680, %v834
        %v853 = vmul.f32 %v681, %v834
        %v854 = vmul.f32 %v682, %v834
        %v855 = vmul.f32 %v683, %v834
        %v856 = vmul.f32 %v684, %v834
        %v857 = vmul.f32 %v685, %v834
        %v858 = vmul.f32 %v686, %v834
        %v859 = vmul.f32 %v687, %v834
        %v860 = vmul.f32 %v688, %v834
        %v861 = vmul.f32 %v689, %v834
        %v862 = vmul.f32 %v690, %v834
        %v863 = vmul.f32 %v691, %v834
        %v864 = vmul.f32 %v692, %v834
        %v865 = vmul.f32 %v693, %v834
        %v866 = vmul.f32 %v694, %v834
        %v867 = vadd.f32 %v799, %v835
        %v868 = vadd.f32 %v800, %v836
        %v869 = vadd.f32 %v801, %v837
        %v870 = vadd.f32 %v802, %v838
        %v871 = vadd.f32 %v803, %v839
        %v872 = vadd.f32 %v804, %v840
        %v873 = vadd.f32 %v805, %v841
        %v874 = vadd.f32 %v806, %v842
        %v875 = vadd.f32 %v807, %v843
        %v876 = vadd.f32 %v808, %v844
        %v877 = vadd.f32 %v809, %v845
        %v878 = vadd.f32 %v810, %v846
        %v879 = vadd.f32 %v811, %v847
        %v880 = vadd.f32 %v812, %v848
        %v881 = vadd.f32 %v813, %v849
        %v882 = vadd.f32 %v814, %v850
        %v883 = vadd.f32 %v815, %v851
        %v884 = vadd.f32 %v816, %v852
        %v885 = vadd.f32 %v817, %v853
        %v886 = vadd.f32 %v818, %v854
        %v887 = vadd.f32 %v819, %v855
        %v888 = vadd.f32 %v820, %v856
        %v889 = vadd.f32 %v821, %v857
        %v890 = vadd.f32 %v822, %v858
        %v891 = vadd.f32 %v823, %v859
        %v892 = vadd.f32 %v824, %v860
        %v893 = vadd.f32 %v825, %v861
        %v894 = vadd.f32 %v826, %v862
        %v895 = vadd.f32 %v827, %v863
        %v896 = vadd.f32 %v828, %v864
        %v897 = vadd.f32 %v829, %v865
        %v898 = vadd.f32 %v830, %v866
        %v899 = vld [vmem:[#allocation2 + $0x2] sm:$0xff]
        %v900 = vld [vmem:[#allocation2 + $0xa] sm:$0xff]
        %v901 = vld [vmem:[#allocation2 + $0x1a] sm:$0xff]
        %v902 = vld [vmem:[#allocation2 + $0x22] sm:$0xff]
        %v903 = vld [vmem:[#allocation2 + $0x32] sm:$0xff]
        %v904 = vld [vmem:[#allocation2 + $0x3a] sm:$0xff]
        %v905 = vld [vmem:[#allocation2 + $0x4a] sm:$0xff]
        %v906 = vld [vmem:[#allocation2 + $0x52] sm:$0xff]
        %v907 = vld [vmem:[#allocation2 + $0x62] sm:$0xff]
        %v908 = vld [vmem:[#allocation2 + $0x6a] sm:$0xff]
        %v909 = vld [vmem:[#allocation2 + $0x7a] sm:$0xff]
        %v910 = vld [vmem:[#allocation2 + $0x82] sm:$0xff]
        %v911 = vld [vmem:[#allocation2 + $0x92] sm:$0xff]
        %v912 = vld [vmem:[#allocation2 + $0x9a] sm:$0xff]
        %v913 = vld [vmem:[#allocation2 + $0xaa] sm:$0xff]
        %v914 = vld [vmem:[#allocation2 + $0xb2] sm:$0xff]
        %v915 = vld [vmem:[#allocation2 + $0xc2] sm:$0xff]
        %v916 = vld [vmem:[#allocation2 + $0xca] sm:$0xff]
        %v917 = vld [vmem:[#allocation2 + $0xda] sm:$0xff]
        %v918 = vld [vmem:[#allocation2 + $0xe2] sm:$0xff]
        %v919 = vld [vmem:[#allocation2 + $0xf2] sm:$0xff]
        %v920 = vld [vmem:[#allocation2 + $0xfa] sm:$0xff]
        %v921 = vld [vmem:[#allocation2 + $0x10a] sm:$0xff]
        %v922 = vld [vmem:[#allocation2 + $0x112] sm:$0xff]
        %v923 = vld [vmem:[#allocation2 + $0x122] sm:$0xff]
        %v924 = vld [vmem:[#allocation2 + $0x12a] sm:$0xff]
        %v925 = vld [vmem:[#allocation2 + $0x13a] sm:$0xff]
        %v926 = vld [vmem:[#allocation2 + $0x142] sm:$0xff]
        %v927 = vld [vmem:[#allocation2 + $0x152] sm:$0xff]
        %v928 = vld [vmem:[#allocation2 + $0x15a] sm:$0xff]
        %v929 = vld [vmem:[#allocation2 + $0x16a] sm:$0xff]
        %v930 = vld [vmem:[#allocation2 + $0x172] sm:$0xff]
        %v931 = vld [vmem:[#allocation2 + $0x182] sm:$0xff]
        %v932 = vld [vmem:[#allocation2 + $0x18a] sm:$0xff]
        %v933 = vld [vmem:[#allocation2 + $0x19a] sm:$0xff]
        %v934 = vld [vmem:[#allocation2 + $0x1a2] sm:$0xff]
        %v935 = vlaneseq
        %v936 = vshrl.u32 %v935, 7
        %v937 = vsub.s32 2, %v936
        %v938 = vrot.slane %v417, %v937
        %v939 = vmul.f32 %v899, %v938
        %v940 = vmul.f32 %v900, %v938
        %v941 = vmul.f32 %v901, %v938
        %v942 = vmul.f32 %v902, %v938
        %v943 = vmul.f32 %v903, %v938
        %v944 = vmul.f32 %v904, %v938
        %v945 = vmul.f32 %v905, %v938
        %v946 = vmul.f32 %v906, %v938
        %v947 = vmul.f32 %v907, %v938
        %v948 = vmul.f32 %v908, %v938
        %v949 = vmul.f32 %v909, %v938
        %v950 = vmul.f32 %v910, %v938
        %v951 = vmul.f32 %v911, %v938
        %v952 = vmul.f32 %v912, %v938
        %v953 = vmul.f32 %v913, %v938
        %v954 = vmul.f32 %v914, %v938
        %v955 = vmul.f32 %v915, %v938
        %v956 = vmul.f32 %v916, %v938
        %v957 = vmul.f32 %v917, %v938
        %v958 = vmul.f32 %v918, %v938
        %v959 = vmul.f32 %v919, %v938
        %v960 = vmul.f32 %v920, %v938
        %v961 = vmul.f32 %v921, %v938
        %v962 = vmul.f32 %v922, %v938
        %v963 = vmul.f32 %v923, %v938
        %v964 = vmul.f32 %v924, %v938
        %v965 = vmul.f32 %v925, %v938
        %v966 = vmul.f32 %v926, %v938
        %v967 = vmul.f32 %v927, %v938
        %v968 = vmul.f32 %v928, %v938
        %v969 = vmul.f32 %v929, %v938
        %v970 = vmul.f32 %v930, %v938
        %v971 = vadd.f32 %v867, %v939
        %v972 = vadd.f32 %v868, %v940
        %v973 = vadd.f32 %v869, %v941
        %v974 = vadd.f32 %v870, %v942
        %v975 = vadd.f32 %v871, %v943
        %v976 = vadd.f32 %v872, %v944
        %v977 = vadd.f32 %v873, %v945
        %v978 = vadd.f32 %v874, %v946
        %v979 = vadd.f32 %v875, %v947
        %v980 = vadd.f32 %v876, %v948
        %v981 = vadd.f32 %v877, %v949
        %v982 = vadd.f32 %v878, %v950
        %v983 = vadd.f32 %v879, %v951
        %v984 = vadd.f32 %v880, %v952
        %v985 = vadd.f32 %v881, %v953
        %v986 = vadd.f32 %v882, %v954
        %v987 = vadd.f32 %v883, %v955
        %v988 = vadd.f32 %v884, %v956
        %v989 = vadd.f32 %v885, %v957
        %v990 = vadd.f32 %v886, %v958
        %v991 = vadd.f32 %v887, %v959
        %v992 = vadd.f32 %v888, %v960
        %v993 = vadd.f32 %v889, %v961
        %v994 = vadd.f32 %v890, %v962
        %v995 = vadd.f32 %v891, %v963
        %v996 = vadd.f32 %v892, %v964
        %v997 = vadd.f32 %v893, %v965
        %v998 = vadd.f32 %v894, %v966
        %v999 = vadd.f32 %v895, %v967
        %v1000 = vadd.f32 %v896, %v968
        %v1001 = vadd.f32 %v897, %v969
        %v1002 = vadd.f32 %v898, %v970
        %v1003 = vlaneseq
        %v1004 = vshrl.u32 %v1003, 7
        %v1005 = vsub.s32 5, %v1004
        %v1006 = vrot.slane %v417, %v1005
        %v1007 = vmul.f32 %v901, %v1006
        %v1008 = vmul.f32 %v902, %v1006
        %v1009 = vmul.f32 %v903, %v1006
        %v1010 = vmul.f32 %v904, %v1006
        %v1011 = vmul.f32 %v905, %v1006
        %v1012 = vmul.f32 %v906, %v1006
        %v1013 = vmul.f32 %v907, %v1006
        %v1014 = vmul.f32 %v908, %v1006
        %v1015 = vmul.f32 %v909, %v1006
        %v1016 = vmul.f32 %v910, %v1006
        %v1017 = vmul.f32 %v911, %v1006
        %v1018 = vmul.f32 %v912, %v1006
        %v1019 = vmul.f32 %v913, %v1006
        %v1020 = vmul.f32 %v914, %v1006
        %v1021 = vmul.f32 %v915, %v1006
        %v1022 = vmul.f32 %v916, %v1006
        %v1023 = vmul.f32 %v917, %v1006
        %v1024 = vmul.f32 %v918, %v1006
        %v1025 = vmul.f32 %v919, %v1006
        %v1026 = vmul.f32 %v920, %v1006
        %v1027 = vmul.f32 %v921, %v1006
        %v1028 = vmul.f32 %v922, %v1006
        %v1029 = vmul.f32 %v923, %v1006
        %v1030 = vmul.f32 %v924, %v1006
        %v1031 = vmul.f32 %v925, %v1006
        %v1032 = vmul.f32 %v926, %v1006
        %v1033 = vmul.f32 %v927, %v1006
        %v1034 = vmul.f32 %v928, %v1006
        %v1035 = vmul.f32 %v929, %v1006
        %v1036 = vmul.f32 %v930, %v1006
        %v1037 = vmul.f32 %v931, %v1006
        %v1038 = vmul.f32 %v932, %v1006
        %v1039 = vadd.f32 %v971, %v1007
        %v1040 = vadd.f32 %v972, %v1008
        %v1041 = vadd.f32 %v973, %v1009
        %v1042 = vadd.f32 %v974, %v1010
        %v1043 = vadd.f32 %v975, %v1011
        %v1044 = vadd.f32 %v976, %v1012
        %v1045 = vadd.f32 %v977, %v1013
        %v1046 = vadd.f32 %v978, %v1014
        %v1047 = vadd.f32 %v979, %v1015
        %v1048 = vadd.f32 %v980, %v1016
        %v1049 = vadd.f32 %v981, %v1017
        %v1050 = vadd.f32 %v982, %v1018
        %v1051 = vadd.f32 %v983, %v1019
        %v1052 = vadd.f32 %v984, %v1020
        %v1053 = vadd.f32 %v985, %v1021
        %v1054 = vadd.f32 %v986, %v1022
        %v1055 = vadd.f32 %v987, %v1023
        %v1056 = vadd.f32 %v988, %v1024
        %v1057 = vadd.f32 %v989, %v1025
        %v1058 = vadd.f32 %v990, %v1026
        %v1059 = vadd.f32 %v991, %v1027
        %v1060 = vadd.f32 %v992, %v1028
        %v1061 = vadd.f32 %v993, %v1029
        %v1062 = vadd.f32 %v994, %v1030
        %v1063 = vadd.f32 %v995, %v1031
        %v1064 = vadd.f32 %v996, %v1032
        %v1065 = vadd.f32 %v997, %v1033
        %v1066 = vadd.f32 %v998, %v1034
        %v1067 = vadd.f32 %v999, %v1035
        %v1068 = vadd.f32 %v1000, %v1036
        %v1069 = vadd.f32 %v1001, %v1037
        %v1070 = vadd.f32 %v1002, %v1038
        %v1071 = vlaneseq
        %v1072 = vshrl.u32 %v1071, 7
        %v1073 = vsub.s32 0, %v1072
        %v1074 = vrot.slane %v418, %v1073
        %v1075 = vmul.f32 %v903, %v1074
        %v1076 = vmul.f32 %v904, %v1074
        %v1077 = vmul.f32 %v905, %v1074
        %v1078 = vmul.f32 %v906, %v1074
        %v1079 = vmul.f32 %v907, %v1074
        %v1080 = vmul.f32 %v908, %v1074
        %v1081 = vmul.f32 %v909, %v1074
        %v1082 = vmul.f32 %v910, %v1074
        %v1083 = vmul.f32 %v911, %v1074
        %v1084 = vmul.f32 %v912, %v1074
        %v1085 = vmul.f32 %v913, %v1074
        %v1086 = vmul.f32 %v914, %v1074
        %v1087 = vmul.f32 %v915, %v1074
        %v1088 = vmul.f32 %v916, %v1074
        %v1089 = vmul.f32 %v917, %v1074
        %v1090 = vmul.f32 %v918, %v1074
        %v1091 = vmul.f32 %v919, %v1074
        %v1092 = vmul.f32 %v920, %v1074
        %v1093 = vmul.f32 %v921, %v1074
        %v1094 = vmul.f32 %v922, %v1074
        %v1095 = vmul.f32 %v923, %v1074
        %v1096 = vmul.f32 %v924, %v1074
        %v1097 = vmul.f32 %v925, %v1074
        %v1098 = vmul.f32 %v926, %v1074
        %v1099 = vmul.f32 %v927, %v1074
        %v1100 = vmul.f32 %v928, %v1074
        %v1101 = vmul.f32 %v929, %v1074
        %v1102 = vmul.f32 %v930, %v1074
        %v1103 = vmul.f32 %v931, %v1074
        %v1104 = vmul.f32 %v932, %v1074
        %v1105 = vmul.f32 %v933, %v1074
        %v1106 = vmul.f32 %v934, %v1074
        %v1107 = vadd.f32 %v1039, %v1075
        %v1108 = vadd.f32 %v1040, %v1076
        %v1109 = vadd.f32 %v1041, %v1077
        %v1110 = vadd.f32 %v1042, %v1078
        %v1111 = vadd.f32 %v1043, %v1079
        %v1112 = vadd.f32 %v1044, %v1080
        %v1113 = vadd.f32 %v1045, %v1081
        %v1114 = vadd.f32 %v1046, %v1082
        %v1115 = vadd.f32 %v1047, %v1083
        %v1116 = vadd.f32 %v1048, %v1084
        %v1117 = vadd.f32 %v1049, %v1085
        %v1118 = vadd.f32 %v1050, %v1086
        %v1119 = vadd.f32 %v1051, %v1087
        %v1120 = vadd.f32 %v1052, %v1088
        %v1121 = vadd.f32 %v1053, %v1089
        %v1122 = vadd.f32 %v1054, %v1090
        %v1123 = vadd.f32 %v1055, %v1091
        %v1124 = vadd.f32 %v1056, %v1092
        %v1125 = vadd.f32 %v1057, %v1093
        %v1126 = vadd.f32 %v1058, %v1094
        %v1127 = vadd.f32 %v1059, %v1095
        %v1128 = vadd.f32 %v1060, %v1096
        %v1129 = vadd.f32 %v1061, %v1097
        %v1130 = vadd.f32 %v1062, %v1098
        %v1131 = vadd.f32 %v1063, %v1099
        %v1132 = vadd.f32 %v1064, %v1100
        %v1133 = vadd.f32 %v1065, %v1101
        %v1134 = vadd.f32 %v1066, %v1102
        %v1135 = vadd.f32 %v1067, %v1103
        %v1136 = vadd.f32 %v1068, %v1104
        %v1137 = vadd.f32 %v1069, %v1105
        %v1138 = vadd.f32 %v1070, %v1106
        %v1139 = vld [vmem:[%s3] sm:$0xff]
        %v1140 = vld [vmem:[%s3 + $0x8] sm:$0xff]
        %v1141 = vld [vmem:[%s3 + $0x10] sm:$0xff]
        %v1142 = vld [vmem:[%s3 + $0x18] sm:$0xff]
        %v1143 = vld [vmem:[%s3 + $0x20] sm:$0xff]
        %v1144 = vld [vmem:[%s3 + $0x28] sm:$0xff]
        %v1145 = vld [vmem:[%s3 + $0x30] sm:$0xff]
        %v1146 = vld [vmem:[%s3 + $0x38] sm:$0xff]
        %v1147 = vld [vmem:[%s3 + $0x40] sm:$0xff]
        %v1148 = vld [vmem:[%s3 + $0x48] sm:$0xff]
        %v1149 = vld [vmem:[%s3 + $0x50] sm:$0xff]
        %v1150 = vld [vmem:[%s3 + $0x58] sm:$0xff]
        %v1151 = vld [vmem:[%s3 + $0x60] sm:$0xff]
        %v1152 = vld [vmem:[%s3 + $0x68] sm:$0xff]
        %v1153 = vld [vmem:[%s3 + $0x70] sm:$0xff]
        %v1154 = vld [vmem:[%s3 + $0x78] sm:$0xff]
        %1155 = vmatprep.subr.mxu0 0.0
        %1156 = vmatpush1.msra.mxu0 %v1139
        %1157 = vmatprep.subr.mxu0 0.0
        %1158 = vmatpush1.msra.mxu0 %v1140
        %1159 = vmatprep.subr.mxu0 0.0
        %1160 = vmatpush1.msra.mxu0 %v1141
        %1161 = vmatprep.subr.mxu0 0.0
        %1162 = vmatpush1.msra.mxu0 %v1142
        %1163 = vmatprep.subr.mxu0 0.0
        %1164 = vmatpush1.msra.mxu0 %v1143
        %1165 = vmatprep.subr.mxu0 0.0
        %1166 = vmatpush1.msra.mxu0 %v1144
        %1167 = vmatprep.subr.mxu0 0.0
        %1168 = vmatpush1.msra.mxu0 %v1145
        %1169 = vmatprep.subr.mxu0 0.0
        %1170 = vmatpush1.msra.mxu0 %v1146
        %1171 = vmatprep.subr.mxu0 0.0
        %1172 = vmatpush1.msra.mxu0 %v1147
        %1173 = vmatprep.subr.mxu0 0.0
        %1174 = vmatpush1.msra.mxu0 %v1148
        %1175 = vmatprep.subr.mxu0 0.0
        %1176 = vmatpush1.msra.mxu0 %v1149
        %1177 = vmatprep.subr.mxu0 0.0
        %1178 = vmatpush1.msra.mxu0 %v1150
        %1179 = vmatprep.subr.mxu0 0.0
        %1180 = vmatpush1.msra.mxu0 %v1151
        %1181 = vmatprep.subr.mxu0 0.0
        %1182 = vmatpush1.msra.mxu0 %v1152
        %1183 = vmatprep.subr.mxu0 0.0
        %1184 = vmatpush1.msra.mxu0 %v1153
        %1185 = vmatprep.subr.mxu0 0.0
        %1186 = vmatpush1.msra.mxu0 %v1154
        %1187 = vmatprep.subr.mxu0 0.0
        %1188 = vmatpush1.msra.mxu0 0.0
        %1189 = vmatprep.subr.mxu0 0.0
        %1190 = vmatpush1.msra.mxu0 0.0
        %1191 = vmatprep.subr.mxu0 0.0
        %1192 = vmatpush1.msra.mxu0 0.0
        %1193 = vmatprep.subr.mxu0 0.0
        %1194 = vmatpush1.msra.mxu0 0.0
        %1195 = vmatprep.subr.mxu0 0.0
        %1196 = vmatpush1.msra.mxu0 0.0
        %1197 = vmatprep.subr.mxu0 0.0
        %1198 = vmatpush1.msra.mxu0 0.0
        %1199 = vmatprep.subr.mxu0 0.0
        %1200 = vmatpush1.msra.mxu0 0.0
        %1201 = vmatprep.subr.mxu0 0.0
        %1202 = vmatpush1.msra.mxu0 0.0
        %1203 = vmatprep.subr.mxu0 0.0
        %1204 = vmatpush1.msra.mxu0 0.0
        %1205 = vmatprep.subr.mxu0 0.0
        %1206 = vmatpush1.msra.mxu0 0.0
        %1207 = vmatprep.subr.mxu0 0.0
        %1208 = vmatpush1.msra.mxu0 0.0
        %1209 = vmatprep.subr.mxu0 0.0
        %1210 = vmatpush1.msra.mxu0 0.0
        %1211 = vmatprep.subr.mxu0 0.0
        %1212 = vmatpush1.msra.mxu0 0.0
        %1213 = vmatprep.subr.mxu0 0.0
        %1214 = vmatpush1.msra.mxu0 0.0
        %1215 = vmatprep.subr.mxu0 0.0
        %1216 = vmatpush1.msra.mxu0 0.0
        %1217 = vmatprep.subr.mxu0 0.0
        %1218 = vmatpush1.msra.mxu0 0.0
        %1219 = vmatprep.mubr.f32.mxu0 0.0
        %1220 = vmatmul.mubr.f32.gmra.mrb[0].mxu0 %v1107
        %v1221 = vpop.f32.mrb[0].mxu0
        %v1222 = vadd.f32 0.0, %v1221
        %v1223 = vpop.f32.mrb[0].mxu0
        %1224 = vmatprep.mubr.f32.mxu0 0.0
        %1225 = vmatmul.mubr.f32.gmra.mrb[0].mxu0 %v1108
        %v1226 = vpop.f32.mrb[0].mxu0
        %v1227 = vadd.f32 0.0, %v1226
        %v1228 = vpop.f32.mrb[0].mxu0
        %1229 = vmatprep.mubr.f32.mxu0 0.0
        %1230 = vmatmul.mubr.f32.gmra.mrb[0].mxu0 %v1109
        %v1231 = vpop.f32.mrb[0].mxu0
        %v1232 = vadd.f32 0.0, %v1231
        %v1233 = vpop.f32.mrb[0].mxu0
        %1234 = vmatprep.mubr.f32.mxu0 0.0
        %1235 = vmatmul.mubr.f32.gmra.mrb[0].mxu0 %v1110
        %v1236 = vpop.f32.mrb[0].mxu0
        %v1237 = vadd.f32 0.0, %v1236
        %v1238 = vpop.f32.mrb[0].mxu0
        %1239 = vmatprep.mubr.f32.mxu0 0.0
        %1240 = vmatmul.mubr.f32.gmra.mrb[0].mxu0 %v1111
        %v1241 = vpop.f32.mrb[0].mxu0
        %v1242 = vadd.f32 0.0, %v1241
        %v1243 = vpop.f32.mrb[0].mxu0
        %1244 = vmatprep.mubr.f32.mxu0 0.0
        %1245 = vmatmul.mubr.f32.gmra.mrb[0].mxu0 %v1112
        %v1246 = vpop.f32.mrb[0].mxu0
        %v1247 = vadd.f32 0.0, %v1246
        %v1248 = vpop.f32.mrb[0].mxu0
        %1249 = vmatprep.mubr.f32.mxu0 0.0
        %1250 = vmatmul.mubr.f32.gmra.mrb[0].mxu0 %v1113
        %v1251 = vpop.f32.mrb[0].mxu0
        %v1252 = vadd.f32 0.0, %v1251
        %v1253 = vpop.f32.mrb[0].mxu0
        %1254 = vmatprep.mubr.f32.mxu0 0.0
        %1255 = vmatmul.mubr.f32.gmra.mrb[0].mxu0 %v1114
        %v1256 = vpop.f32.mrb[0].mxu0
        %v1257 = vadd.f32 0.0, %v1256
        %v1258 = vpop.f32.mrb[0].mxu0
        %1259 = vmatprep.mubr.f32.mxu0 0.0
        %1260 = vmatmul.mubr.f32.gmra.mrb[0].mxu0 %v1115
        %v1261 = vpop.f32.mrb[0].mxu0
        %v1262 = vadd.f32 0.0, %v1261
        %v1263 = vpop.f32.mrb[0].mxu0
        %1264 = vmatprep.mubr.f32.mxu0 0.0
        %1265 = vmatmul.mubr.f32.gmra.mrb[0].mxu0 %v1116
        %v1266 = vpop.f32.mrb[0].mxu0
        %v1267 = vadd.f32 0.0, %v1266
        %v1268 = vpop.f32.mrb[0].mxu0
        %1269 = vmatprep.mubr.f32.mxu0 0.0
        %1270 = vmatmul.mubr.f32.gmra.mrb[0].mxu0 %v1117
        %v1271 = vpop.f32.mrb[0].mxu0
        %v1272 = vadd.f32 0.0, %v1271
        %v1273 = vpop.f32.mrb[0].mxu0
        %1274 = vmatprep.mubr.f32.mxu0 0.0
        %1275 = vmatmul.mubr.f32.gmra.mrb[0].mxu0 %v1118
        %v1276 = vpop.f32.mrb[0].mxu0
        %v1277 = vadd.f32 0.0, %v1276
        %v1278 = vpop.f32.mrb[0].mxu0
        %1279 = vmatprep.mubr.f32.mxu0 0.0
        %1280 = vmatmul.mubr.f32.gmra.mrb[0].mxu0 %v1119
        %v1281 = vpop.f32.mrb[0].mxu0
        %v1282 = vadd.f32 0.0, %v1281
        %v1283 = vpop.f32.mrb[0].mxu0
        %1284 = vmatprep.mubr.f32.mxu0 0.0
        %1285 = vmatmul.mubr.f32.gmra.mrb[0].mxu0 %v1120
        %v1286 = vpop.f32.mrb[0].mxu0
        %v1287 = vadd.f32 0.0, %v1286
        %v1288 = vpop.f32.mrb[0].mxu0
        %1289 = vmatprep.mubr.f32.mxu0 0.0
        %1290 = vmatmul.mubr.f32.gmra.mrb[0].mxu0 %v1121
        %v1291 = vpop.f32.mrb[0].mxu0
        %v1292 = vadd.f32 0.0, %v1291
        %v1293 = vpop.f32.mrb[0].mxu0
        %1294 = vmatprep.mubr.f32.mxu0 0.0
        %1295 = vmatmul.mubr.f32.gmra.mrb[0].mxu0 %v1122
        %v1296 = vpop.f32.mrb[0].mxu0
        %v1297 = vadd.f32 0.0, %v1296
        %v1298 = vpop.f32.mrb[0].mxu0
        %1299 = vmatprep.mubr.f32.mxu0 0.0
        %1300 = vmatmul.mubr.f32.gmra.mrb[0].mxu0 %v1123
        %v1301 = vpop.f32.mrb[0].mxu0
        %v1302 = vadd.f32 0.0, %v1301
        %v1303 = vpop.f32.mrb[0].mxu0
        %1304 = vmatprep.mubr.f32.mxu0 0.0
        %1305 = vmatmul.mubr.f32.gmra.mrb[0].mxu0 %v1124
        %v1306 = vpop.f32.mrb[0].mxu0
        %v1307 = vadd.f32 0.0, %v1306
        %v1308 = vpop.f32.mrb[0].mxu0
        %1309 = vmatprep.mubr.f32.mxu0 0.0
        %1310 = vmatmul.mubr.f32.gmra.mrb[0].mxu0 %v1125
        %v1311 = vpop.f32.mrb[0].mxu0
        %v1312 = vadd.f32 0.0, %v1311
        %v1313 = vpop.f32.mrb[0].mxu0
        %1314 = vmatprep.mubr.f32.mxu0 0.0
        %1315 = vmatmul.mubr.f32.gmra.mrb[0].mxu0 %v1126
        %v1316 = vpop.f32.mrb[0].mxu0
        %v1317 = vadd.f32 0.0, %v1316
        %v1318 = vpop.f32.mrb[0].mxu0
        %1319 = vmatprep.mubr.f32.mxu0 0.0
        %1320 = vmatmul.mubr.f32.gmra.mrb[0].mxu0 %v1127
        %v1321 = vpop.f32.mrb[0].mxu0
        %v1322 = vadd.f32 0.0, %v1321
        %v1323 = vpop.f32.mrb[0].mxu0
        %1324 = vmatprep.mubr.f32.mxu0 0.0
        %1325 = vmatmul.mubr.f32.gmra.mrb[0].mxu0 %v1128
        %v1326 = vpop.f32.mrb[0].mxu0
        %v1327 = vadd.f32 0.0, %v1326
        %v1328 = vpop.f32.mrb[0].mxu0
        %1329 = vmatprep.mubr.f32.mxu0 0.0
        %1330 = vmatmul.mubr.f32.gmra.mrb[0].mxu0 %v1129
        %v1331 = vpop.f32.mrb[0].mxu0
        %v1332 = vadd.f32 0.0, %v1331
        %v1333 = vpop.f32.mrb[0].mxu0
        %1334 = vmatprep.mubr.f32.mxu0 0.0
        %1335 = vmatmul.mubr.f32.gmra.mrb[0].mxu0 %v1130
        %v1336 = vpop.f32.mrb[0].mxu0
        %v1337 = vadd.f32 0.0, %v1336
        %v1338 = vpop.f32.mrb[0].mxu0
        %1339 = vmatprep.mubr.f32.mxu0 0.0
        %1340 = vmatmul.mubr.f32.gmra.mrb[0].mxu0 %v1131
        %v1341 = vpop.f32.mrb[0].mxu0
        %v1342 = vadd.f32 0.0, %v1341
        %v1343 = vpop.f32.mrb[0].mxu0
        %1344 = vmatprep.mubr.f32.mxu0 0.0
        %1345 = vmatmul.mubr.f32.gmra.mrb[0].mxu0 %v1132
        %v1346 = vpop.f32.mrb[0].mxu0
        %v1347 = vadd.f32 0.0, %v1346
        %v1348 = vpop.f32.mrb[0].mxu0
        %1349 = vmatprep.mubr.f32.mxu0 0.0
        %1350 = vmatmul.mubr.f32.gmra.mrb[0].mxu0 %v1133
        %v1351 = vpop.f32.mrb[0].mxu0
        %v1352 = vadd.f32 0.0, %v1351
        %v1353 = vpop.f32.mrb[0].mxu0
        %1354 = vmatprep.mubr.f32.mxu0 0.0
        %1355 = vmatmul.mubr.f32.gmra.mrb[0].mxu0 %v1134
        %v1356 = vpop.f32.mrb[0].mxu0
        %v1357 = vadd.f32 0.0, %v1356
        %v1358 = vpop.f32.mrb[0].mxu0
        %1359 = vmatprep.mubr.f32.mxu0 0.0
        %1360 = vmatmul.mubr.f32.gmra.mrb[0].mxu0 %v1135
        %v1361 = vpop.f32.mrb[0].mxu0
        %v1362 = vadd.f32 0.0, %v1361
        %v1363 = vpop.f32.mrb[0].mxu0
        %1364 = vmatprep.mubr.f32.mxu0 0.0
        %1365 = vmatmul.mubr.f32.gmra.mrb[0].mxu0 %v1136
        %v1366 = vpop.f32.mrb[0].mxu0
        %v1367 = vadd.f32 0.0, %v1366
        %v1368 = vpop.f32.mrb[0].mxu0
        %1369 = vmatprep.mubr.f32.mxu0 0.0
        %1370 = vmatmul.mubr.f32.gmra.mrb[0].mxu0 %v1137
        %v1371 = vpop.f32.mrb[0].mxu0
        %v1372 = vadd.f32 0.0, %v1371
        %v1373 = vpop.f32.mrb[0].mxu0
        %1374 = vmatprep.mubr.f32.mxu0 0.0
        %1375 = vmatmul.mubr.f32.gmra.mrb[0].mxu0 %v1138
        %v1376 = vpop.f32.mrb[0].mxu0
        %v1377 = vadd.f32 0.0, %v1376
        %v1378 = vpop.f32.mrb[0].mxu0
        %1379 = vdwg.mxu0
        %1380 = vst [vmem:[%s270] sm:$0xff] %v1222
        %1381 = vst [vmem:[%s270 + $0x8] sm:$0xff] %v1227
        %1382 = vst [vmem:[%s270 + $0x10] sm:$0xff] %v1232
        %1383 = vst [vmem:[%s270 + $0x18] sm:$0xff] %v1237
        %1384 = vst [vmem:[%s270 + $0x20] sm:$0xff] %v1242
        %1385 = vst [vmem:[%s270 + $0x28] sm:$0xff] %v1247
        %1386 = vst [vmem:[%s270 + $0x30] sm:$0xff] %v1252
        %1387 = vst [vmem:[%s270 + $0x38] sm:$0xff] %v1257
        %1388 = vst [vmem:[%s270 + $0x40] sm:$0xff] %v1262
        %1389 = vst [vmem:[%s270 + $0x48] sm:$0xff] %v1267
        %1390 = vst [vmem:[%s270 + $0x50] sm:$0xff] %v1272
        %1391 = vst [vmem:[%s270 + $0x58] sm:$0xff] %v1277
        %1392 = vst [vmem:[%s270 + $0x60] sm:$0xff] %v1282
        %1393 = vst [vmem:[%s270 + $0x68] sm:$0xff] %v1287
        %1394 = vst [vmem:[%s270 + $0x70] sm:$0xff] %v1292
        %1395 = vst [vmem:[%s270 + $0x78] sm:$0xff] %v1297
        %1396 = vst [vmem:[%s270 + $0x80] sm:$0xff] %v1302
        %1397 = vst [vmem:[%s270 + $0x88] sm:$0xff] %v1307
        %1398 = vst [vmem:[%s270 + $0x90] sm:$0xff] %v1312
        %1399 = vst [vmem:[%s270 + $0x98] sm:$0xff] %v1317
        %1400 = vst [vmem:[%s270 + $0xa0] sm:$0xff] %v1322
        %1401 = vst [vmem:[%s270 + $0xa8] sm:$0xff] %v1327
        %1402 = vst [vmem:[%s270 + $0xb0] sm:$0xff] %v1332
        %1403 = vst [vmem:[%s270 + $0xb8] sm:$0xff] %v1337
        %1404 = vst [vmem:[%s270 + $0xc0] sm:$0xff] %v1342
        %1405 = vst [vmem:[%s270 + $0xc8] sm:$0xff] %v1347
        %1406 = vst [vmem:[%s270 + $0xd0] sm:$0xff] %v1352
        %1407 = vst [vmem:[%s270 + $0xd8] sm:$0xff] %v1357
        %1408 = vst [vmem:[%s270 + $0xe0] sm:$0xff] %v1362
        %1409 = vst [vmem:[%s270 + $0xe8] sm:$0xff] %v1367
        %1410 = vst [vmem:[%s270 + $0xf0] sm:$0xff] %v1372
        %1411 = vst [vmem:[%s270 + $0xf8] sm:$0xff] %v1377
        %s1412 = sand.u32 %s142, 1
        %s1413 = scalar_lea.sflag [#allocation4], %s1412
        %s1414 = sand.u32 %s142, 1
        %s1415 = smul.addr %s1414, 256
        %s1416 = scalar_lea.vmem [#allocation3], %s1415
        // Predicated region
        $region37: #{tpu_custom_call.1} parent=35 // pred_check
          %p1417 = pneg %p152
        $region38: #{tpu_custom_call.1} parent=35 // pred_check_branch
          %1419 = sbr.rel (%p1417) target = $region40
        $region39: #{tpu_custom_call.1} parent=35 // pred_region
          %s1420 = smul.u32 16, %s23
          %s1422 = ssub.s32 4096, 4096
          %1423 = vsyncadd %s1413, %s1422
          %s1424 = smul.addr %s1420, 2
          %s1425 = smul.addr %s22, 32
          %s1426 = sadd.s32 %s1424, %s1425
          %s1427 = smul.addr %s1426, 128
          %s1428 = scalar_lea.hbm %s4, %s1427
          %s1429 = sshll.u32 %s1416, 4
          %s1430 = int_to_ptr.vmem [resolvable:$true] %s1429
          %1435 = dma.vmem_to_hbm [thread:$0]  %s1430, 4096, %s1428, %s1413, 128, 128, 8
        $region40: #{tpu_custom_call.1} parent=35 // pred_fallthru
          _
      $region36: #{tpu_custom_call.1} parent=5 // pred_fallthru
        _
      %p1436 = scmp.le.s32.totalorder 2, %s13
      // Predicated region
      $region41: #{tpu_custom_call.1} parent=5 // pred_check
        %p1437 = pneg %p1436
      $region42: #{tpu_custom_call.1} parent=5 // pred_check_branch
        %1439 = sbr.rel (%p1437) target = $region44
      $region43: #{tpu_custom_call.1} parent=5 // pred_region
        %s1440 = ssub.s32 %s13, 2
        // Predicated region
        $region45: #{tpu_custom_call.1} parent=43 // pred_check
          %p1441 = pneg %p158
        $region46: #{tpu_custom_call.1} parent=43 // pred_check_branch
          %1443 = sbr.rel (%p1441) target = $region48
        $region47: #{tpu_custom_call.1} parent=43 // pred_region
          %s1444 = sand.u32 %s143, 1
          %s1445 = scalar_lea.sflag [#allocation4], %s1444
          %s1446 = sand.u32 %s143, 1
          %s1447 = smul.addr %s1446, 256
          %s1448 = scalar_lea.vmem [#allocation3], %s1447
          %1449 = dma.done %s1445, 4096
        $region48: #{tpu_custom_call.1} parent=43 // pred_fallthru
          _
      $region44: #{tpu_custom_call.1} parent=5 // pred_fallthru
        _
    $region6: #{tpu_custom_call.1} parent=1 // loop_footer
      %s17 = sadd.s32 1, %s13
    $region7: #{tpu_custom_call.1} parent=1 // loop_footer_branch
      %12 = sbr.rel target = $region3
    $region8: #{tpu_custom_call.1} parent=1 // loop_exit
      _
    %1450 = vsyncpa [#allocation4], 1
    %s1451 = scalar_lea.sflag [#allocation4], 1
    %1452 = vsyncpa %s1451, 1

</llo_original>
